<compile_context>
chip_gen: v6e
topology: v6e:2x2x1
jax: 0.10.0
libtpu: 0.0.40
codegen_flags: <defaults>
</compile_context>

<pallas_src>
import functools

import jax
import jax.numpy as jnp
from jax.experimental import pallas as pl
from jax.experimental.pallas import tpu as pltpu

LN_EPS = 1e-5   # torch.nn.LayerNorm default
LANE = 128      # padded lane width for every feature dim
N_PAD = 128     # padded node-count dimension (toy sizes all fit in one tile)


# ----------------------------- fused Pallas kernel ---------------------------

def make_fused_kernel(num_layer, hidden, n_pad):
    """Full GNN forward for `num_layer` SAGE layers, all activations in VMEM.

    Ref layout: x0, then per layer (AS, W_neigh, W_root, bias, gamma, beta),
    then (W_fc, b_fc), then out_ref.  AS = [A ; one_hot(target_lids)] stacked
    vertically, so one MXU pass yields both the mean aggregation and the
    dst-row gather.  Padded lanes of every intermediate stay exactly zero.
    """
    inv_h = 1.0 / float(hidden)

    def kernel(*refs):
        x_ref = refs[0]
        layer_refs = refs[1:1 + 6 * num_layer]
        wfc_ref, bfc_ref, out_ref = refs[1 + 6 * num_layer:]

        x = x_ref[...]                                       # bf16 [n_pad, LANE]
        for i in range(num_layer):
            as_ref, wn_ref, wr_ref, b_ref, g_ref, bt_ref = layer_refs[6 * i:6 * (i + 1)]

            # One MXU pass: rows [:n_pad] = mean aggregation, rows [n_pad:] = dst gather.
            agg_xd = jnp.dot(as_ref[...], x, preferred_element_type=jnp.float32)
            agg = agg_xd[:n_pad].astype(jnp.bfloat16)        # sublane-aligned split
            xd = agg_xd[n_pad:].astype(jnp.bfloat16)

            # Fused SAGE projection as two accumulating 128-lane dots (no concat).
            h = (jnp.dot(agg, wn_ref[...], preferred_element_type=jnp.float32)
                 + jnp.dot(xd, wr_ref[...], preferred_element_type=jnp.float32)
                 + b_ref[...])

            # LayerNorm over the logical `hidden` lanes, sum / sum-of-squares form.
            # Padded lanes of h are exactly 0 (zero-padded W columns & bias), so the
            # 128-lane reductions equal the logical-`hidden` reductions — no mask.
            mu = jnp.sum(h, axis=-1, keepdims=True) * inv_h
            sq = jnp.sum(h * h, axis=-1, keepdims=True) * inv_h
            var = sq - mu * mu
            hn = (h - mu) * jax.lax.rsqrt(var + LN_EPS)
            # gamma/beta are zero in padded lanes -> padded lanes return to 0.
            hn = hn * g_ref[...] + bt_ref[...]

            # ReLU (dropout is identity at eval); next-layer MXU operand in bf16.
            x = jnp.maximum(hn, 0.0).astype(jnp.bfloat16)

        # Final classifier (lane-dense padded output; sliced in the wrapper).
        out_ref[...] = (jnp.dot(x, wfc_ref[...], preferred_element_type=jnp.float32)
                        + bfc_ref[...])

    return kernel


def fused_gnn_pallas(x0, layer_args, w_fc, b_fc, num_layer, hidden, n_pad):
    args = [x0]
    for la in layer_args:
        args.extend(la)
    args += [w_fc, b_fc]

    # Advisory cost estimate so XLA schedules surrounding glue around the call.
    flops = 0
    for _ in range(num_layer):
        flops += 2 * (2 * n_pad) * n_pad * LANE      # stacked agg/gather dot
        flops += 2 * 2 * n_pad * LANE * LANE         # two SAGE weight dots
    flops += 2 * n_pad * LANE * LANE                 # final fc
    transcendentals = num_layer * n_pad              # rsqrt per row per layer
    bytes_accessed = sum(int(a.size) * a.dtype.itemsize for a in args)
    bytes_accessed += n_pad * LANE * 4               # fp32 output

    return pl.pallas_call(
        make_fused_kernel(num_layer, hidden, n_pad),
        in_specs=[pl.BlockSpec(memory_space=pltpu.MemorySpace.VMEM) for _ in args],
        out_specs=pl.BlockSpec(memory_space=pltpu.MemorySpace.VMEM),
        out_shape=jax.ShapeDtypeStruct((n_pad, LANE), jnp.float32),
        cost_estimate=pl.CostEstimate(flops=flops,
                                      transcendentals=transcendentals,
                                      bytes_accessed=bytes_accessed),
    )(*args)


# ------------------------------- model glue ----------------------------------

def _pad2(x, rows, cols, dtype):
    out = jnp.zeros((rows, cols), dtype)
    return out.at[:x.shape[0], :x.shape[1]].set(x.astype(dtype))


def pack_params(params, hidden):
    """One-time packing of model weights into MXU-friendly padded buffers.

    Invariant (relied on by the in-kernel mask-free LayerNorm): all padded
    rows/columns of W_neigh/W_root and padded lanes of bias/gamma/beta are
    EXACTLY zero, so padded lanes of every activation stay zero.
    """
    packed_layers = []
    for (wn, wr, b, g, bt) in params["layers"]:
        wn_p = _pad2(wn, LANE, LANE, jnp.bfloat16)
        wr_p = _pad2(wr, LANE, LANE, jnp.bfloat16)
        b_p = _pad2(b, 1, LANE, jnp.float32)
        g_p = _pad2(g, 1, LANE, jnp.float32)      # zero-padded -> clears pad lanes
        bt_p = _pad2(bt, 1, LANE, jnp.float32)
        packed_layers.append((wn_p, wr_p, b_p, g_p, bt_p))
    w_fc, b_fc = params["fc"]
    w_fc_p = _pad2(w_fc, LANE, LANE, jnp.bfloat16)
    b_fc_p = _pad2(b_fc, 1, LANE, jnp.float32)
    return {"layers": packed_layers, "fc": (w_fc_p, b_fc_p)}


@functools.partial(jax.jit, static_argnames=("class_count", "hidden", "n_pad"))
def homo_gnn_forward(node_feat, labels_layer0, out_deg, in_deg,
                     A_list, target_lids, target_pos, packed,
                     class_count, hidden, n_pad):
    """Mirrors HomoGNNModel.gnn_model_fn after the wholegraph sampling stage.

    Per-batch work only: feature construction written straight into the padded
    [n_pad, LANE] bf16 buffer, per-layer stacked aggregation matrices, and one
    fused Pallas kernel call.  All weight packing is done once in pack_params.
    """
    # ---- feature construction (use_label + use_deg), directly into x0 -------
    labels_masked = labels_layer0.at[target_pos].set(class_count)
    label_feat = jax.nn.one_hot(labels_masked, class_count, dtype=jnp.float32)
    od = out_deg.astype(jnp.float32)[:, None]
    idg = in_deg.astype(jnp.float32)[:, None]
    deg_feat = jnp.sqrt(jnp.concatenate([od, idg, od + idg], axis=-1)) / 10.0

    n0, d_nf = node_feat.shape
    x0 = jnp.zeros((n_pad, LANE), jnp.bfloat16)
    x0 = x0.at[:n0, :d_nf].set(node_feat.astype(jnp.bfloat16))
    x0 = x0.at[:n0, d_nf:d_nf + class_count].set(label_feat.astype(jnp.bfloat16))
    x0 = x0.at[:n0, d_nf + class_count:d_nf + class_count + 3].set(
        deg_feat.astype(jnp.bfloat16))
    # embedding_dropout -> identity (eval)
    # TODO(synk): at production n_src, build x0 in-kernel to avoid one HBM round trip.

    num_layer = len(A_list)
    layer_args = []
    for i in range(num_layer):
        wn_p, wr_p, b_p, g_p, bt_p = packed["layers"][i]
        n_dst, n_src = A_list[i].shape
        # Stacked [A ; one_hot(target_lids)] padded to [2*n_pad, n_pad] (bf16 MXU op).
        # NOTE: A is cast to bf16 for the MXU; keep it fp32 if closer parity with a
        # fp32 reference is required.
        sel = jax.nn.one_hot(target_lids[i], n_src, dtype=jnp.float32)
        as_mat = jnp.zeros((2 * n_pad, n_pad), jnp.bfloat16)
        as_mat = as_mat.at[:n_dst, :n_src].set(A_list[i].astype(jnp.bfloat16))
        as_mat = as_mat.at[n_pad:n_pad + n_dst, :n_src].set(sel.astype(jnp.bfloat16))
        layer_args.append((as_mat, wn_p, wr_p, b_p, g_p, bt_p))

    w_fc_p, b_fc_p = packed["fc"]
    out_pad = fused_gnn_pallas(x0, layer_args, w_fc_p, b_fc_p,
                               num_layer, hidden, n_pad)

    batch = target_lids[-1].shape[0]
    out_feat = out_pad[:batch, :class_count]
    label = labels_layer0[target_pos]            # gather_value_by_gid of batch labels
    return out_feat, label


def reference_forward(node_feat, labels_layer0, out_deg, in_deg,
                      A_list, target_lids, target_pos, params, class_count):
    """Pure-JAX fp32 reference of the same forward (for a sanity check)."""
    labels_masked = labels_layer0.at[target_pos].set(class_count)
    label_feat = jax.nn.one_hot(labels_masked, class_count, dtype=jnp.float32)
    od = out_deg.astype(jnp.float32)[:, None]
    idg = in_deg.astype(jnp.float32)[:, None]
    deg_feat = jnp.sqrt(jnp.concatenate([od, idg, od + idg], axis=-1)) / 10.0
    x = jnp.concatenate([node_feat, label_feat, deg_feat], axis=-1)
    for i, (wn, wr, b, g, bt) in enumerate(params["layers"]):
        agg = A_list[i] @ x
        xd = x[target_lids[i]]
        h = agg @ wn + xd @ wr + b
        mu = jnp.mean(h, -1, keepdims=True)
        var = jnp.mean((h - mu) ** 2, -1, keepdims=True)
        h = (h - mu) * jax.lax.rsqrt(var + LN_EPS)
        h = h * g + bt
        x = jnp.maximum(h, 0.0)
    w_fc, b_fc = params["fc"]
    return x @ w_fc + b_fc


# ---------------------------------- main --------------------------------------

if __name__ == "__main__":
    key = jax.random.PRNGKey(0)

    # small shapes consistent with the module
    batch = 16                       # options.batchsize
    num_layer = 2
    hidden = 32                      # hidden_feat_dim (heads=1)
    class_count = 8
    node_feat_dim = 16
    max_neighboor = [4, 4]
    n_nodes = [64, 32, batch]        # |target_gids[0]|, |target_gids[1]|, |target_gids[2]|
    in_feat_dim = node_feat_dim + class_count + 3   # use_label + use_deg

    ks = jax.random.split(key, 16)

    # ----- simulated sampling outputs (wholegraph ops are untranslatable) ----
    # TODO(synk): torch.ops.wholegraph.unweighted_sample / global_gather /
    # gather_value_by_gid / homograph_rawid_to_globalid have no Pallas
    # equivalent; simulated here as dense aggregation matrices + index lists.
    node_feat = jax.random.normal(ks[0], (n_nodes[0], node_feat_dim), jnp.float32)
    labels_layer0 = jax.random.randint(ks[1], (n_nodes[0],), 0, class_count)
    out_deg = jax.random.randint(ks[2], (n_nodes[0],), 1, 20)
    in_deg = jax.random.randint(ks[3], (n_nodes[0],), 1, 20)

    # target_lids[i]: positions of target_gids[i+1] nodes inside target_gids[i]
    target_lids = [
        jax.random.permutation(ks[4], n_nodes[0])[: n_nodes[1]].astype(jnp.int32),
        jax.random.permutation(ks[5], n_nodes[1])[: n_nodes[2]].astype(jnp.int32),
    ]
    # positions of the original batch nodes inside target_gids[0]
    target_pos = target_lids[0][target_lids[1]]

    # row-normalized mean-aggregation matrices A_i : [n_dst, n_src]
    A_list = []
    for i in range(num_layer):
        n_src, n_dst, kfan = n_nodes[i], n_nodes[i + 1], max_neighboor[i]
        nbr = jax.random.randint(ks[6 + i], (n_dst, kfan), 0, n_src)
        A = jnp.sum(jax.nn.one_hot(nbr, n_src, dtype=jnp.float32), axis=1)
        A = A / jnp.maximum(jnp.sum(A, axis=1, keepdims=True), 1.0)  # no NaN on empty rows
        A_list.append(A)

    # ----- deterministic parameter init (shapes from __init__) --------------
    def lin_init(k, fan_in, fan_out):
        return jax.random.normal(k, (fan_in, fan_out), jnp.float32) / jnp.sqrt(
            jnp.float32(fan_in))

    layer_params = []
    dims_in = [in_feat_dim, hidden]
    for i in range(num_layer):
        kk = jax.random.split(ks[8 + i], 3)
        wn = lin_init(kk[0], dims_in[i], hidden)        # SAGE lin_l
        wr = lin_init(kk[1], dims_in[i], hidden)        # SAGE lin_r
        b = 0.01 * jax.random.normal(kk[2], (1, hidden), jnp.float32)
        gamma = jnp.ones((1, hidden), jnp.float32)      # LayerNorm weight
        beta = jnp.zeros((1, hidden), jnp.float32)      # LayerNorm bias
        layer_params.append((wn, wr, b, gamma, beta))

    w_fc = lin_init(ks[10], hidden, class_count)
    b_fc = jnp.zeros((1, class_count), jnp.float32)
    params = {"layers": layer_params, "fc": (w_fc, b_fc)}

    # One-time parameter packing (hoisted out of the per-batch forward).
    packed = pack_params(params, hidden)
    packed = jax.tree_util.tree_map(jax.block_until_ready, packed)

    out_feat, label = homo_gnn_forward(
        node_feat, labels_layer0, out_deg, in_deg,
        A_list, target_lids, target_pos, packed,
        class_count=class_count, hidden=hidden, n_pad=N_PAD)

    out_feat = jax.block_until_ready(out_feat)
    label = jax.block_until_ready(label)
    assert out_feat.shape == (batch, class_count)
    assert label.shape == (batch,)
    assert bool(jnp.all(jnp.isfinite(out_feat)))

    # sanity check vs fp32 pure-JAX reference (kernel uses bf16 MXU operands)
    out_ref = reference_forward(node_feat, labels_layer0, out_deg, in_deg,
                                A_list, target_lids, target_pos, params,
                                class_count)
    err = float(jnp.max(jnp.abs(out_feat - out_ref)))
    assert err < 0.2, f"kernel/reference mismatch: max abs err = {err}"

    print("KERNEL_OK")
</pallas_src>

<mosaic_0001>
module attributes {stable_mosaic.version = 11 : i64} {
  func.func @kernel(%arg0: memref<128x128xbf16, #tpu.memory_space<vmem>>, %arg1: memref<256x128xbf16, #tpu.memory_space<vmem>>, %arg2: memref<128x128xbf16, #tpu.memory_space<vmem>>, %arg3: memref<128x128xbf16, #tpu.memory_space<vmem>>, %arg4: memref<1x128xf32, #tpu.memory_space<vmem>>, %arg5: memref<1x128xf32, #tpu.memory_space<vmem>>, %arg6: memref<1x128xf32, #tpu.memory_space<vmem>>, %arg7: memref<256x128xbf16, #tpu.memory_space<vmem>>, %arg8: memref<128x128xbf16, #tpu.memory_space<vmem>>, %arg9: memref<128x128xbf16, #tpu.memory_space<vmem>>, %arg10: memref<1x128xf32, #tpu.memory_space<vmem>>, %arg11: memref<1x128xf32, #tpu.memory_space<vmem>>, %arg12: memref<1x128xf32, #tpu.memory_space<vmem>>, %arg13: memref<128x128xbf16, #tpu.memory_space<vmem>>, %arg14: memref<1x128xf32, #tpu.memory_space<vmem>>, %arg15: memref<128x128xf32, #tpu.memory_space<vmem>>) attributes {dimension_semantics = [], scalar_prefetch = 0 : i64, scratch_operands = 0 : i64, tpu.core_type = #tpu.core_type<tc>} {
    %c0 = arith.constant 0 : index
    %c0_0 = arith.constant 0 : index
    %0 = vector.load %arg0[%c0, %c0_0] : memref<128x128xbf16, #tpu.memory_space<vmem>>, vector<128x128xbf16>
    %c0_1 = arith.constant 0 : index
    %c0_2 = arith.constant 0 : index
    %1 = vector.load %arg1[%c0_1, %c0_2] : memref<256x128xbf16, #tpu.memory_space<vmem>>, vector<256x128xbf16>
    %cst = arith.constant dense<0.000000e+00> : vector<256x128xf32>
    %2 = tpu.matmul %1, %0, %cst {dimension_numbers = #tpu.dot_dimension_numbers<[1], [0], [0], [1], [0, 0, 1, 1], [], []>} : vector<256x128xbf16>, vector<128x128xbf16>, vector<256x128xf32> -> vector<256x128xf32>
    %3 = vector.extract_strided_slice %2 {offsets = [0, 0], sizes = [128, 128], strides = [1, 1]} : vector<256x128xf32> to vector<128x128xf32>
    %4 = arith.truncf %3 : vector<128x128xf32> to vector<128x128xbf16>
    %5 = vector.extract_strided_slice %2 {offsets = [128, 0], sizes = [128, 128], strides = [1, 1]} : vector<256x128xf32> to vector<128x128xf32>
    %6 = arith.truncf %5 : vector<128x128xf32> to vector<128x128xbf16>
    %c0_3 = arith.constant 0 : index
    %c0_4 = arith.constant 0 : index
    %7 = vector.load %arg2[%c0_3, %c0_4] : memref<128x128xbf16, #tpu.memory_space<vmem>>, vector<128x128xbf16>
    %cst_5 = arith.constant dense<0.000000e+00> : vector<128x128xf32>
    %8 = tpu.matmul %4, %7, %cst_5 {dimension_numbers = #tpu.dot_dimension_numbers<[1], [0], [0], [1], [0, 0, 1, 1], [], []>} : vector<128x128xbf16>, vector<128x128xbf16>, vector<128x128xf32> -> vector<128x128xf32>
    %c0_6 = arith.constant 0 : index
    %c0_7 = arith.constant 0 : index
    %9 = vector.load %arg3[%c0_6, %c0_7] : memref<128x128xbf16, #tpu.memory_space<vmem>>, vector<128x128xbf16>
    %cst_8 = arith.constant dense<0.000000e+00> : vector<128x128xf32>
    %10 = tpu.matmul %6, %9, %cst_8 {dimension_numbers = #tpu.dot_dimension_numbers<[1], [0], [0], [1], [0, 0, 1, 1], [], []>} : vector<128x128xbf16>, vector<128x128xbf16>, vector<128x128xf32> -> vector<128x128xf32>
    %11 = arith.addf %8, %10 : vector<128x128xf32>
    %c0_9 = arith.constant 0 : index
    %c0_10 = arith.constant 0 : index
    %12 = vector.load %arg4[%c0_9, %c0_10] : memref<1x128xf32, #tpu.memory_space<vmem>>, vector<1x128xf32>
    %13 = vector.broadcast %12 : vector<1x128xf32> to vector<128x128xf32>
    %14 = arith.addf %11, %13 : vector<128x128xf32>
    %cst_11 = arith.constant dense<0.000000e+00> : vector<128xf32>
    %15 = vector.multi_reduction <add>, %14, %cst_11 [1] : vector<128x128xf32> to vector<128xf32>
    %16 = vector.shape_cast %15 : vector<128xf32> to vector<128x1xf32>
    %cst_12 = arith.constant 3.125000e-02 : f32
    %17 = vector.broadcast %cst_12 : f32 to vector<128x1xf32>
    %18 = arith.mulf %16, %17 : vector<128x1xf32>
    %19 = arith.mulf %14, %14 : vector<128x128xf32>
    %cst_13 = arith.constant dense<0.000000e+00> : vector<128xf32>
    %20 = vector.multi_reduction <add>, %19, %cst_13 [1] : vector<128x128xf32> to vector<128xf32>
    %21 = vector.shape_cast %20 : vector<128xf32> to vector<128x1xf32>
    %cst_14 = arith.constant 3.125000e-02 : f32
    %22 = vector.broadcast %cst_14 : f32 to vector<128x1xf32>
    %23 = arith.mulf %21, %22 : vector<128x1xf32>
    %24 = arith.mulf %18, %18 : vector<128x1xf32>
    %25 = arith.subf %23, %24 : vector<128x1xf32>
    %26 = vector.broadcast %18 : vector<128x1xf32> to vector<128x128xf32>
    %27 = arith.subf %14, %26 : vector<128x128xf32>
    %cst_15 = arith.constant 9.99999974E-6 : f32
    %28 = vector.broadcast %cst_15 : f32 to vector<128x1xf32>
    %29 = arith.addf %25, %28 : vector<128x1xf32>
    %30 = math.rsqrt %29 : vector<128x1xf32>
    %31 = vector.broadcast %30 : vector<128x1xf32> to vector<128x128xf32>
    %32 = arith.mulf %27, %31 : vector<128x128xf32>
    %c0_16 = arith.constant 0 : index
    %c0_17 = arith.constant 0 : index
    %33 = vector.load %arg5[%c0_16, %c0_17] : memref<1x128xf32, #tpu.memory_space<vmem>>, vector<1x128xf32>
    %34 = vector.broadcast %33 : vector<1x128xf32> to vector<128x128xf32>
    %35 = arith.mulf %32, %34 : vector<128x128xf32>
    %c0_18 = arith.constant 0 : index
    %c0_19 = arith.constant 0 : index
    %36 = vector.load %arg6[%c0_18, %c0_19] : memref<1x128xf32, #tpu.memory_space<vmem>>, vector<1x128xf32>
    %37 = vector.broadcast %36 : vector<1x128xf32> to vector<128x128xf32>
    %38 = arith.addf %35, %37 : vector<128x128xf32>
    %cst_20 = arith.constant 0.000000e+00 : f32
    %39 = vector.broadcast %cst_20 : f32 to vector<128x128xf32>
    %40 = arith.maximumf %38, %39 : vector<128x128xf32>
    %41 = arith.truncf %40 : vector<128x128xf32> to vector<128x128xbf16>
    %c0_21 = arith.constant 0 : index
    %c0_22 = arith.constant 0 : index
    %42 = vector.load %arg7[%c0_21, %c0_22] : memref<256x128xbf16, #tpu.memory_space<vmem>>, vector<256x128xbf16>
    %cst_23 = arith.constant dense<0.000000e+00> : vector<256x128xf32>
    %43 = tpu.matmul %42, %41, %cst_23 {dimension_numbers = #tpu.dot_dimension_numbers<[1], [0], [0], [1], [0, 0, 1, 1], [], []>} : vector<256x128xbf16>, vector<128x128xbf16>, vector<256x128xf32> -> vector<256x128xf32>
    %44 = vector.extract_strided_slice %43 {offsets = [0, 0], sizes = [128, 128], strides = [1, 1]} : vector<256x128xf32> to vector<128x128xf32>
    %45 = arith.truncf %44 : vector<128x128xf32> to vector<128x128xbf16>
    %46 = vector.extract_strided_slice %43 {offsets = [128, 0], sizes = [128, 128], strides = [1, 1]} : vector<256x128xf32> to vector<128x128xf32>
    %47 = arith.truncf %46 : vector<128x128xf32> to vector<128x128xbf16>
    %c0_24 = arith.constant 0 : index
    %c0_25 = arith.constant 0 : index
    %48 = vector.load %arg8[%c0_24, %c0_25] : memref<128x128xbf16, #tpu.memory_space<vmem>>, vector<128x128xbf16>
    %cst_26 = arith.constant dense<0.000000e+00> : vector<128x128xf32>
    %49 = tpu.matmul %45, %48, %cst_26 {dimension_numbers = #tpu.dot_dimension_numbers<[1], [0], [0], [1], [0, 0, 1, 1], [], []>} : vector<128x128xbf16>, vector<128x128xbf16>, vector<128x128xf32> -> vector<128x128xf32>
    %c0_27 = arith.constant 0 : index
    %c0_28 = arith.constant 0 : index
    %50 = vector.load %arg9[%c0_27, %c0_28] : memref<128x128xbf16, #tpu.memory_space<vmem>>, vector<128x128xbf16>
    %cst_29 = arith.constant dense<0.000000e+00> : vector<128x128xf32>
    %51 = tpu.matmul %47, %50, %cst_29 {dimension_numbers = #tpu.dot_dimension_numbers<[1], [0], [0], [1], [0, 0, 1, 1], [], []>} : vector<128x128xbf16>, vector<128x128xbf16>, vector<128x128xf32> -> vector<128x128xf32>
    %52 = arith.addf %49, %51 : vector<128x128xf32>
    %c0_30 = arith.constant 0 : index
    %c0_31 = arith.constant 0 : index
    %53 = vector.load %arg10[%c0_30, %c0_31] : memref<1x128xf32, #tpu.memory_space<vmem>>, vector<1x128xf32>
    %54 = vector.broadcast %53 : vector<1x128xf32> to vector<128x128xf32>
    %55 = arith.addf %52, %54 : vector<128x128xf32>
    %cst_32 = arith.constant dense<0.000000e+00> : vector<128xf32>
    %56 = vector.multi_reduction <add>, %55, %cst_32 [1] : vector<128x128xf32> to vector<128xf32>
    %57 = vector.shape_cast %56 : vector<128xf32> to vector<128x1xf32>
    %cst_33 = arith.constant 3.125000e-02 : f32
    %58 = vector.broadcast %cst_33 : f32 to vector<128x1xf32>
    %59 = arith.mulf %57, %58 : vector<128x1xf32>
    %60 = arith.mulf %55, %55 : vector<128x128xf32>
    %cst_34 = arith.constant dense<0.000000e+00> : vector<128xf32>
    %61 = vector.multi_reduction <add>, %60, %cst_34 [1] : vector<128x128xf32> to vector<128xf32>
    %62 = vector.shape_cast %61 : vector<128xf32> to vector<128x1xf32>
    %cst_35 = arith.constant 3.125000e-02 : f32
    %63 = vector.broadcast %cst_35 : f32 to vector<128x1xf32>
    %64 = arith.mulf %62, %63 : vector<128x1xf32>
    %65 = arith.mulf %59, %59 : vector<128x1xf32>
    %66 = arith.subf %64, %65 : vector<128x1xf32>
    %67 = vector.broadcast %59 : vector<128x1xf32> to vector<128x128xf32>
    %68 = arith.subf %55, %67 : vector<128x128xf32>
    %cst_36 = arith.constant 9.99999974E-6 : f32
    %69 = vector.broadcast %cst_36 : f32 to vector<128x1xf32>
    %70 = arith.addf %66, %69 : vector<128x1xf32>
    %71 = math.rsqrt %70 : vector<128x1xf32>
    %72 = vector.broadcast %71 : vector<128x1xf32> to vector<128x128xf32>
    %73 = arith.mulf %68, %72 : vector<128x128xf32>
    %c0_37 = arith.constant 0 : index
    %c0_38 = arith.constant 0 : index
    %74 = vector.load %arg11[%c0_37, %c0_38] : memref<1x128xf32, #tpu.memory_space<vmem>>, vector<1x128xf32>
    %75 = vector.broadcast %74 : vector<1x128xf32> to vector<128x128xf32>
    %76 = arith.mulf %73, %75 : vector<128x128xf32>
    %c0_39 = arith.constant 0 : index
    %c0_40 = arith.constant 0 : index
    %77 = vector.load %arg12[%c0_39, %c0_40] : memref<1x128xf32, #tpu.memory_space<vmem>>, vector<1x128xf32>
    %78 = vector.broadcast %77 : vector<1x128xf32> to vector<128x128xf32>
    %79 = arith.addf %76, %78 : vector<128x128xf32>
    %cst_41 = arith.constant 0.000000e+00 : f32
    %80 = vector.broadcast %cst_41 : f32 to vector<128x128xf32>
    %81 = arith.maximumf %79, %80 : vector<128x128xf32>
    %82 = arith.truncf %81 : vector<128x128xf32> to vector<128x128xbf16>
    %c0_42 = arith.constant 0 : index
    %c0_43 = arith.constant 0 : index
    %83 = vector.load %arg13[%c0_42, %c0_43] : memref<128x128xbf16, #tpu.memory_space<vmem>>, vector<128x128xbf16>
    %cst_44 = arith.constant dense<0.000000e+00> : vector<128x128xf32>
    %84 = tpu.matmul %82, %83, %cst_44 {dimension_numbers = #tpu.dot_dimension_numbers<[1], [0], [0], [1], [0, 0, 1, 1], [], []>} : vector<128x128xbf16>, vector<128x128xbf16>, vector<128x128xf32> -> vector<128x128xf32>
    %c0_45 = arith.constant 0 : index
    %c0_46 = arith.constant 0 : index
    %85 = vector.load %arg14[%c0_45, %c0_46] : memref<1x128xf32, #tpu.memory_space<vmem>>, vector<1x128xf32>
    %86 = vector.broadcast %85 : vector<1x128xf32> to vector<128x128xf32>
    %87 = arith.addf %84, %86 : vector<128x128xf32>
    %c0_47 = arith.constant 0 : index
    %c0_48 = arith.constant 0 : index
    %88 = vector.load %arg15[%c0_47, %c0_48] : memref<128x128xf32, #tpu.memory_space<vmem>>, vector<128x128xf32>
    tpu.vector_store %arg15[%c0_47, %c0_48], %87 {strides = array<i32>} : memref<128x128xf32, #tpu.memory_space<vmem>>, vector<128x128xf32>,
    return
  }
}

</mosaic_0001>

<llo_original>
// kernel: homo_gnn_forward.1
$region0: #{homo_gnn_forward.1}
  #allocation0 [shape = 'u32[]', space=smem, size = 0x4, offset = 0x4, fixed_abs, tag = 'smem constant byte address 0x4 - core index']
  #allocation1 [shape = 'u32[144,128]{1,0:T(1,128)}', space=vmem, size = 0x12000, scoped, tag = 'internal scratch']
  %s0 = inlined_call_operand.vmem [shape: bf16[128,128], index: 0, kind: input, shape index: {}]
  %s1 = inlined_call_operand.vmem [shape: bf16[256,128], index: 1, kind: input, shape index: {}]
  %s2 = inlined_call_operand.vmem [shape: bf16[128,128], index: 2, kind: input, shape index: {}]
  %s3 = inlined_call_operand.vmem [shape: bf16[128,128], index: 3, kind: input, shape index: {}]
  %s4 = inlined_call_operand.vmem [shape: f32[1,128], index: 4, kind: input, shape index: {}]
  %s5 = inlined_call_operand.vmem [shape: f32[1,128], index: 5, kind: input, shape index: {}]
  %s6 = inlined_call_operand.vmem [shape: f32[1,128], index: 6, kind: input, shape index: {}]
  %s7 = inlined_call_operand.vmem [shape: bf16[256,128], index: 7, kind: input, shape index: {}]
  %s8 = inlined_call_operand.vmem [shape: bf16[128,128], index: 8, kind: input, shape index: {}]
  %s9 = inlined_call_operand.vmem [shape: bf16[128,128], index: 9, kind: input, shape index: {}]
  %s10 = inlined_call_operand.vmem [shape: f32[1,128], index: 10, kind: input, shape index: {}]
  %s11 = inlined_call_operand.vmem [shape: f32[1,128], index: 11, kind: input, shape index: {}]
  %s12 = inlined_call_operand.vmem [shape: f32[1,128], index: 12, kind: input, shape index: {}]
  %s13 = inlined_call_operand.vmem [shape: bf16[128,128], index: 13, kind: input, shape index: {}]
  %s14 = inlined_call_operand.vmem [shape: f32[1,128], index: 14, kind: input, shape index: {}]
  %s15 = inlined_call_operand.vmem [shape: f32[128,128], index: 15, kind: output, shape index: {}]
  %s16 = sld [smem:[#allocation0]]
  $region70: #{homo_gnn_forward.1} parent=0
    _
  %s18 = ssub.s32 1, %s16
  %s19 = scalar_select 0, %s18, %s16
  // Predicated region
  $region2: #{homo_gnn_forward.1} parent=0 // pred_check
    _
  $region3: #{homo_gnn_forward.1} parent=0 // pred_check_branch
    %21 = sbr.rel (0) target = $region5
  $region4: #{homo_gnn_forward.1} parent=0 // pred_region
    _
  $region5: #{homo_gnn_forward.1} parent=0 // pred_fallthru
    _
  // Predicated region
  $region6: #{homo_gnn_forward.1} parent=0 // pred_check
    _
  $region7: #{homo_gnn_forward.1} parent=0 // pred_check_branch
    %23 = sbr.rel (0) target = $region9
  $region8: #{homo_gnn_forward.1} parent=0 // pred_region
    _
  $region9: #{homo_gnn_forward.1} parent=0 // pred_fallthru
    _
  // Predicated region
  $region10: #{homo_gnn_forward.1} parent=0 // pred_check
    _
  $region11: #{homo_gnn_forward.1} parent=0 // pred_check_branch
    %25 = sbr.rel (0) target = $region13
  $region12: #{homo_gnn_forward.1} parent=0 // pred_region
    _
  $region13: #{homo_gnn_forward.1} parent=0 // pred_fallthru
    _
  // Predicated region
  $region14: #{homo_gnn_forward.1} parent=0 // pred_check
    _
  $region15: #{homo_gnn_forward.1} parent=0 // pred_check_branch
    %27 = sbr.rel (0) target = $region17
  $region16: #{homo_gnn_forward.1} parent=0 // pred_region
    _
  $region17: #{homo_gnn_forward.1} parent=0 // pred_fallthru
    _
  // Predicated region
  $region18: #{homo_gnn_forward.1} parent=0 // pred_check
    _
  $region19: #{homo_gnn_forward.1} parent=0 // pred_check_branch
    %29 = sbr.rel (0) target = $region21
  $region20: #{homo_gnn_forward.1} parent=0 // pred_region
    _
  $region21: #{homo_gnn_forward.1} parent=0 // pred_fallthru
    _
  // Predicated region
  $region22: #{homo_gnn_forward.1} parent=0 // pred_check
    _
  $region23: #{homo_gnn_forward.1} parent=0 // pred_check_branch
    %31 = sbr.rel (0) target = $region25
  $region24: #{homo_gnn_forward.1} parent=0 // pred_region
    _
  $region25: #{homo_gnn_forward.1} parent=0 // pred_fallthru
    _
  // Predicated region
  $region26: #{homo_gnn_forward.1} parent=0 // pred_check
    _
  $region27: #{homo_gnn_forward.1} parent=0 // pred_check_branch
    %33 = sbr.rel (0) target = $region29
  $region28: #{homo_gnn_forward.1} parent=0 // pred_region
    _
  $region29: #{homo_gnn_forward.1} parent=0 // pred_fallthru
    _
  // Predicated region
  $region30: #{homo_gnn_forward.1} parent=0 // pred_check
    _
  $region31: #{homo_gnn_forward.1} parent=0 // pred_check_branch
    %35 = sbr.rel (0) target = $region33
  $region32: #{homo_gnn_forward.1} parent=0 // pred_region
    _
  $region33: #{homo_gnn_forward.1} parent=0 // pred_fallthru
    _
  // Predicated region
  $region34: #{homo_gnn_forward.1} parent=0 // pred_check
    _
  $region35: #{homo_gnn_forward.1} parent=0 // pred_check_branch
    %37 = sbr.rel (0) target = $region37
  $region36: #{homo_gnn_forward.1} parent=0 // pred_region
    _
  $region37: #{homo_gnn_forward.1} parent=0 // pred_fallthru
    _
  // Predicated region
  $region38: #{homo_gnn_forward.1} parent=0 // pred_check
    _
  $region39: #{homo_gnn_forward.1} parent=0 // pred_check_branch
    %39 = sbr.rel (0) target = $region41
  $region40: #{homo_gnn_forward.1} parent=0 // pred_region
    _
  $region41: #{homo_gnn_forward.1} parent=0 // pred_fallthru
    _
  // Predicated region
  $region42: #{homo_gnn_forward.1} parent=0 // pred_check
    _
  $region43: #{homo_gnn_forward.1} parent=0 // pred_check_branch
    %41 = sbr.rel (0) target = $region45
  $region44: #{homo_gnn_forward.1} parent=0 // pred_region
    _
  $region45: #{homo_gnn_forward.1} parent=0 // pred_fallthru
    _
  // Predicated region
  $region46: #{homo_gnn_forward.1} parent=0 // pred_check
    _
  $region47: #{homo_gnn_forward.1} parent=0 // pred_check_branch
    %43 = sbr.rel (0) target = $region49
  $region48: #{homo_gnn_forward.1} parent=0 // pred_region
    _
  $region49: #{homo_gnn_forward.1} parent=0 // pred_fallthru
    _
  // Predicated region
  $region50: #{homo_gnn_forward.1} parent=0 // pred_check
    _
  $region51: #{homo_gnn_forward.1} parent=0 // pred_check_branch
    %45 = sbr.rel (0) target = $region53
  $region52: #{homo_gnn_forward.1} parent=0 // pred_region
    _
  $region53: #{homo_gnn_forward.1} parent=0 // pred_fallthru
    _
  // Predicated region
  $region54: #{homo_gnn_forward.1} parent=0 // pred_check
    _
  $region55: #{homo_gnn_forward.1} parent=0 // pred_check_branch
    %47 = sbr.rel (0) target = $region57
  $region56: #{homo_gnn_forward.1} parent=0 // pred_region
    _
  $region57: #{homo_gnn_forward.1} parent=0 // pred_fallthru
    _
  // Predicated region
  $region58: #{homo_gnn_forward.1} parent=0 // pred_check
    _
  $region59: #{homo_gnn_forward.1} parent=0 // pred_check_branch
    %49 = sbr.rel (0) target = $region61
  $region60: #{homo_gnn_forward.1} parent=0 // pred_region
    _
  $region61: #{homo_gnn_forward.1} parent=0 // pred_fallthru
    _
  %v51 = vld [vmem:[%s0] sm:$0xf]
  %v52 = vld [vmem:[%s0 + $0x4] sm:$0xf]
  %v53 = vld [vmem:[%s0 + $0x8] sm:$0xf]
  %v54 = vld [vmem:[%s0 + $0xc] sm:$0xf]
  %v55 = vld [vmem:[%s0 + $0x10] sm:$0xf]
  %v56 = vld [vmem:[%s0 + $0x14] sm:$0xf]
  %v57 = vld [vmem:[%s0 + $0x18] sm:$0xf]
  %v58 = vld [vmem:[%s0 + $0x1c] sm:$0xf]
  %v59 = vld [vmem:[%s0 + $0x20] sm:$0xf]
  %v60 = vld [vmem:[%s0 + $0x24] sm:$0xf]
  %v61 = vld [vmem:[%s0 + $0x28] sm:$0xf]
  %v62 = vld [vmem:[%s0 + $0x2c] sm:$0xf]
  %v63 = vld [vmem:[%s0 + $0x30] sm:$0xf]
  %v64 = vld [vmem:[%s0 + $0x34] sm:$0xf]
  %v65 = vld [vmem:[%s0 + $0x38] sm:$0xf]
  %v66 = vld [vmem:[%s0 + $0x3c] sm:$0xf]
  %v67 = vld [vmem:[%s1] sm:$0xf]
  %v68 = vld [vmem:[%s1 + $0x4] sm:$0xf]
  %v69 = vld [vmem:[%s1 + $0x8] sm:$0xf]
  %v70 = vld [vmem:[%s1 + $0xc] sm:$0xf]
  %v71 = vld [vmem:[%s1 + $0x10] sm:$0xf]
  %v72 = vld [vmem:[%s1 + $0x14] sm:$0xf]
  %v73 = vld [vmem:[%s1 + $0x18] sm:$0xf]
  %v74 = vld [vmem:[%s1 + $0x1c] sm:$0xf]
  %v75 = vld [vmem:[%s1 + $0x20] sm:$0xf]
  %v76 = vld [vmem:[%s1 + $0x24] sm:$0xf]
  %v77 = vld [vmem:[%s1 + $0x28] sm:$0xf]
  %v78 = vld [vmem:[%s1 + $0x2c] sm:$0xf]
  %v79 = vld [vmem:[%s1 + $0x30] sm:$0xf]
  %v80 = vld [vmem:[%s1 + $0x34] sm:$0xf]
  %v81 = vld [vmem:[%s1 + $0x38] sm:$0xf]
  %v82 = vld [vmem:[%s1 + $0x3c] sm:$0xf]
  %v83 = vld [vmem:[%s1 + $0x40] sm:$0xf]
  %v84 = vld [vmem:[%s1 + $0x44] sm:$0xf]
  %v85 = vld [vmem:[%s1 + $0x48] sm:$0xf]
  %v86 = vld [vmem:[%s1 + $0x4c] sm:$0xf]
  %v87 = vld [vmem:[%s1 + $0x50] sm:$0xf]
  %v88 = vld [vmem:[%s1 + $0x54] sm:$0xf]
  %v89 = vld [vmem:[%s1 + $0x58] sm:$0xf]
  %v90 = vld [vmem:[%s1 + $0x5c] sm:$0xf]
  %v91 = vld [vmem:[%s1 + $0x60] sm:$0xf]
  %v92 = vld [vmem:[%s1 + $0x64] sm:$0xf]
  %v93 = vld [vmem:[%s1 + $0x68] sm:$0xf]
  %v94 = vld [vmem:[%s1 + $0x6c] sm:$0xf]
  %v95 = vld [vmem:[%s1 + $0x70] sm:$0xf]
  %v96 = vld [vmem:[%s1 + $0x74] sm:$0xf]
  %v97 = vld [vmem:[%s1 + $0x78] sm:$0xf]
  %v98 = vld [vmem:[%s1 + $0x7c] sm:$0xf]
  %v131 = vunpack.c.l.b16 %v67
  %v132 = vunpack.c.l.b16 %v68
  %v133 = vunpack.c.l.b16 %v69
  %v134 = vunpack.c.l.b16 %v70
  %v135 = vunpack.c.l.b16 %v71
  %v136 = vunpack.c.l.b16 %v72
  %v137 = vunpack.c.l.b16 %v73
  %v138 = vunpack.c.l.b16 %v74
  %v139 = vunpack.c.l.b16 %v75
  %v140 = vunpack.c.l.b16 %v76
  %v141 = vunpack.c.l.b16 %v77
  %v142 = vunpack.c.l.b16 %v78
  %v143 = vunpack.c.l.b16 %v79
  %v144 = vunpack.c.l.b16 %v80
  %v145 = vunpack.c.l.b16 %v81
  %v146 = vunpack.c.l.b16 %v82
  %v147 = vunpack.c.l.b16 %v83
  %v148 = vunpack.c.l.b16 %v84
  %v149 = vunpack.c.l.b16 %v85
  %v150 = vunpack.c.l.b16 %v86
  %v151 = vunpack.c.l.b16 %v87
  %v152 = vunpack.c.l.b16 %v88
  %v153 = vunpack.c.l.b16 %v89
  %v154 = vunpack.c.l.b16 %v90
  %v155 = vunpack.c.l.b16 %v91
  %v156 = vunpack.c.l.b16 %v92
  %v157 = vunpack.c.l.b16 %v93
  %v158 = vunpack.c.l.b16 %v94
  %v159 = vunpack.c.l.b16 %v95
  %v160 = vunpack.c.l.b16 %v96
  %v161 = vunpack.c.l.b16 %v97
  %v162 = vunpack.c.l.b16 %v98
  %v163 = vpack.c.b16 %v132, %v131
  %v164 = vpack.c.b16 %v134, %v133
  %v165 = vpack.c.b16 %v136, %v135
  %v166 = vpack.c.b16 %v138, %v137
  %v167 = vpack.c.b16 %v140, %v139
  %v168 = vpack.c.b16 %v142, %v141
  %v169 = vpack.c.b16 %v144, %v143
  %v170 = vpack.c.b16 %v146, %v145
  %v171 = vpack.c.b16 %v148, %v147
  %v172 = vpack.c.b16 %v150, %v149
  %v173 = vpack.c.b16 %v152, %v151
  %v174 = vpack.c.b16 %v154, %v153
  %v175 = vpack.c.b16 %v156, %v155
  %v176 = vpack.c.b16 %v158, %v157
  %v177 = vpack.c.b16 %v160, %v159
  %v178 = vpack.c.b16 %v162, %v161
  %v211 = vunpack.c.l.b16 %v51
  %v212 = vunpack.c.l.b16 %v52
  %v213 = vunpack.c.l.b16 %v53
  %v214 = vunpack.c.l.b16 %v54
  %v215 = vunpack.c.l.b16 %v55
  %v216 = vunpack.c.l.b16 %v56
  %v217 = vunpack.c.l.b16 %v57
  %v218 = vunpack.c.l.b16 %v58
  %v219 = vunpack.c.l.b16 %v59
  %v220 = vunpack.c.l.b16 %v60
  %v221 = vunpack.c.l.b16 %v61
  %v222 = vunpack.c.l.b16 %v62
  %v223 = vunpack.c.l.b16 %v63
  %v224 = vunpack.c.l.b16 %v64
  %v225 = vunpack.c.l.b16 %v65
  %v226 = vunpack.c.l.b16 %v66
  %v227 = vpack.c.b16 %v212, %v211
  %v228 = vpack.c.b16 %v214, %v213
  %v229 = vpack.c.b16 %v216, %v215
  %v230 = vpack.c.b16 %v218, %v217
  %v231 = vpack.c.b16 %v220, %v219
  %v232 = vpack.c.b16 %v222, %v221
  %v233 = vpack.c.b16 %v224, %v223
  %v234 = vpack.c.b16 %v226, %v225
  %243 = vmatprep.subr.bf16.mxu0 0
  %244 = vmatpush1.bf16.msra.mxu0 %v234
  %245 = vmatprep.subr.bf16.mxu0 0
  %246 = vmatpush1.bf16.msra.mxu0 %v233
  %247 = vmatprep.subr.bf16.mxu0 0
  %248 = vmatpush1.bf16.msra.mxu0 %v232
  %249 = vmatprep.subr.bf16.mxu0 0
  %250 = vmatpush1.bf16.msra.mxu0 %v231
  %251 = vmatprep.subr.bf16.mxu0 0
  %252 = vmatpush1.bf16.msra.mxu0 %v230
  %253 = vmatprep.subr.bf16.mxu0 0
  %254 = vmatpush1.bf16.msra.mxu0 %v229
  %255 = vmatprep.subr.bf16.mxu0 0
  %256 = vmatpush1.bf16.msra.mxu0 %v228
  %257 = vmatprep.subr.bf16.mxu0 0
  %258 = vmatpush1.bf16.msra.mxu0 %v227
  %259 = vmatprep.subr.bf16.mxu0 0
  %260 = vmatpush2.bf16.msra.mxu0 0
  %261 = vmatprep.subr.bf16.mxu0 0
  %262 = vmatpush2.bf16.msra.mxu0 0
  %263 = vmatprep.subr.bf16.mxu0 0
  %264 = vmatpush2.bf16.msra.mxu0 0
  %265 = vmatprep.subr.bf16.mxu0 0
  %266 = vmatpush2.bf16.msra.mxu0 0
  %267 = vmatprep.subr.bf16.mxu0 0
  %268 = vmatpush2.bf16.msra.mxu0 0
  %269 = vmatprep.subr.bf16.mxu0 0
  %270 = vmatpush2.bf16.msra.mxu0 0
  %271 = vmatprep.subr.bf16.mxu0 0
  %272 = vmatpush2.bf16.msra.mxu0 0
  %273 = vmatprep.subr.bf16.mxu0 0
  %274 = vmatpush2.bf16.msra.mxu0 0
  %275 = vmatprep.mubr.bf16.mxu0 0
  %276 = vmatmul.mubr.bf16.gmra.mxu0 %v163
  %v277 = vpop.f32.mrf.mxu0
  %v278 = vadd.f32 0.0, %v277
  %v279 = vpop.f32.mrf.mxu0
  %v280 = vpop.f32.mrf.mxu0
  %v281 = vadd.f32 0.0, %v280
  %v282 = vpop.f32.mrf.mxu0
  %283 = vmatprep.mubr.bf16.mxu0 0
  %284 = vmatmul.mubr.bf16.gmra.mxu0 %v164
  %v285 = vpop.f32.mrf.mxu0
  %v286 = vadd.f32 0.0, %v285
  %v287 = vpop.f32.mrf.mxu0
  %v288 = vpop.f32.mrf.mxu0
  %v289 = vadd.f32 0.0, %v288
  %v290 = vpop.f32.mrf.mxu0
  %291 = vmatprep.mubr.bf16.mxu0 0
  %292 = vmatmul.mubr.bf16.gmra.mxu0 %v165
  %v293 = vpop.f32.mrf.mxu0
  %v294 = vadd.f32 0.0, %v293
  %v295 = vpop.f32.mrf.mxu0
  %v296 = vpop.f32.mrf.mxu0
  %v297 = vadd.f32 0.0, %v296
  %v298 = vpop.f32.mrf.mxu0
  %299 = vmatprep.mubr.bf16.mxu0 0
  %300 = vmatmul.mubr.bf16.gmra.mxu0 %v166
  %v301 = vpop.f32.mrf.mxu0
  %v302 = vadd.f32 0.0, %v301
  %v303 = vpop.f32.mrf.mxu0
  %v304 = vpop.f32.mrf.mxu0
  %v305 = vadd.f32 0.0, %v304
  %v306 = vpop.f32.mrf.mxu0
  %307 = vmatprep.mubr.bf16.mxu0 0
  %308 = vmatmul.mubr.bf16.gmra.mxu0 %v167
  %v309 = vpop.f32.mrf.mxu0
  %v310 = vadd.f32 0.0, %v309
  %v311 = vpop.f32.mrf.mxu0
  %v312 = vpop.f32.mrf.mxu0
  %v313 = vadd.f32 0.0, %v312
  %v314 = vpop.f32.mrf.mxu0
  %315 = vmatprep.mubr.bf16.mxu0 0
  %316 = vmatmul.mubr.bf16.gmra.mxu0 %v168
  %v317 = vpop.f32.mrf.mxu0
  %v318 = vadd.f32 0.0, %v317
  %v319 = vpop.f32.mrf.mxu0
  %v320 = vpop.f32.mrf.mxu0
  %v321 = vadd.f32 0.0, %v320
  %v322 = vpop.f32.mrf.mxu0
  %323 = vmatprep.mubr.bf16.mxu0 0
  %324 = vmatmul.mubr.bf16.gmra.mxu0 %v169
  %v325 = vpop.f32.mrf.mxu0
  %v326 = vadd.f32 0.0, %v325
  %v327 = vpop.f32.mrf.mxu0
  %v328 = vpop.f32.mrf.mxu0
  %v329 = vadd.f32 0.0, %v328
  %v330 = vpop.f32.mrf.mxu0
  %331 = vmatprep.mubr.bf16.mxu0 0
  %332 = vmatmul.mubr.bf16.gmra.mxu0 %v170
  %v333 = vpop.f32.mrf.mxu0
  %v334 = vadd.f32 0.0, %v333
  %v335 = vpop.f32.mrf.mxu0
  %v336 = vpop.f32.mrf.mxu0
  %v337 = vadd.f32 0.0, %v336
  %v338 = vpop.f32.mrf.mxu0
  %339 = vmatprep.mubr.bf16.mxu0 0
  %340 = vmatmul.mubr.bf16.gmra.mxu0 %v171
  %v341 = vpop.f32.mrf.mxu0
  %v342 = vadd.f32 0.0, %v341
  %v343 = vpop.f32.mrf.mxu0
  %v344 = vpop.f32.mrf.mxu0
  %v345 = vadd.f32 0.0, %v344
  %v346 = vpop.f32.mrf.mxu0
  %347 = vmatprep.mubr.bf16.mxu0 0
  %348 = vmatmul.mubr.bf16.gmra.mxu0 %v172
  %v349 = vpop.f32.mrf.mxu0
  %v350 = vadd.f32 0.0, %v349
  %v351 = vpop.f32.mrf.mxu0
  %v352 = vpop.f32.mrf.mxu0
  %v353 = vadd.f32 0.0, %v352
  %v354 = vpop.f32.mrf.mxu0
  %355 = vmatprep.mubr.bf16.mxu0 0
  %356 = vmatmul.mubr.bf16.gmra.mxu0 %v173
  %v357 = vpop.f32.mrf.mxu0
  %v358 = vadd.f32 0.0, %v357
  %v359 = vpop.f32.mrf.mxu0
  %v360 = vpop.f32.mrf.mxu0
  %v361 = vadd.f32 0.0, %v360
  %v362 = vpop.f32.mrf.mxu0
  %363 = vmatprep.mubr.bf16.mxu0 0
  %364 = vmatmul.mubr.bf16.gmra.mxu0 %v174
  %v365 = vpop.f32.mrf.mxu0
  %v366 = vadd.f32 0.0, %v365
  %v367 = vpop.f32.mrf.mxu0
  %v368 = vpop.f32.mrf.mxu0
  %v369 = vadd.f32 0.0, %v368
  %v370 = vpop.f32.mrf.mxu0
  %371 = vmatprep.mubr.bf16.mxu0 0
  %372 = vmatmul.mubr.bf16.gmra.mxu0 %v175
  %v373 = vpop.f32.mrf.mxu0
  %v374 = vadd.f32 0.0, %v373
  %v375 = vpop.f32.mrf.mxu0
  %v376 = vpop.f32.mrf.mxu0
  %v377 = vadd.f32 0.0, %v376
  %v378 = vpop.f32.mrf.mxu0
  %379 = vmatprep.mubr.bf16.mxu0 0
  %380 = vmatmul.mubr.bf16.gmra.mxu0 %v176
  %v381 = vpop.f32.mrf.mxu0
  %v382 = vadd.f32 0.0, %v381
  %v383 = vpop.f32.mrf.mxu0
  %v384 = vpop.f32.mrf.mxu0
  %v385 = vadd.f32 0.0, %v384
  %v386 = vpop.f32.mrf.mxu0
  %387 = vmatprep.mubr.bf16.mxu0 0
  %388 = vmatmul.mubr.bf16.gmra.mxu0 %v177
  %v389 = vpop.f32.mrf.mxu0
  %v390 = vadd.f32 0.0, %v389
  %v391 = vpop.f32.mrf.mxu0
  %v392 = vpop.f32.mrf.mxu0
  %v393 = vadd.f32 0.0, %v392
  %v394 = vpop.f32.mrf.mxu0
  %395 = vmatprep.mubr.bf16.mxu0 0
  %396 = vmatmul.mubr.bf16.gmra.mxu0 %v178
  %v397 = vpop.f32.mrf.mxu0
  %v398 = vadd.f32 0.0, %v397
  %v399 = vpop.f32.mrf.mxu0
  %v400 = vpop.f32.mrf.mxu0
  %v401 = vadd.f32 0.0, %v400
  %v402 = vpop.f32.mrf.mxu0
  %403 = vdwg.mxu0
  %v404 = vpack.c.bf16 %v281, %v278
  %v405 = vpack.c.bf16 %v289, %v286
  %v406 = vpack.c.bf16 %v297, %v294
  %v407 = vpack.c.bf16 %v305, %v302
  %v408 = vpack.c.bf16 %v313, %v310
  %v409 = vpack.c.bf16 %v321, %v318
  %v410 = vpack.c.bf16 %v329, %v326
  %v411 = vpack.c.bf16 %v337, %v334
  %v412 = vpack.c.bf16 %v345, %v342
  %v413 = vpack.c.bf16 %v353, %v350
  %v414 = vpack.c.bf16 %v361, %v358
  %v415 = vpack.c.bf16 %v369, %v366
  %v416 = vpack.c.bf16 %v377, %v374
  %v417 = vpack.c.bf16 %v385, %v382
  %v418 = vpack.c.bf16 %v393, %v390
  %v419 = vpack.c.bf16 %v401, %v398
  %v420 = vld [vmem:[%s2] sm:$0xf]
  %v421 = vld [vmem:[%s2 + $0x4] sm:$0xf]
  %v422 = vld [vmem:[%s2 + $0x8] sm:$0xf]
  %v423 = vld [vmem:[%s2 + $0xc] sm:$0xf]
  %v424 = vld [vmem:[%s2 + $0x10] sm:$0xf]
  %v425 = vld [vmem:[%s2 + $0x14] sm:$0xf]
  %v426 = vld [vmem:[%s2 + $0x18] sm:$0xf]
  %v427 = vld [vmem:[%s2 + $0x1c] sm:$0xf]
  %v428 = vld [vmem:[%s2 + $0x20] sm:$0xf]
  %v429 = vld [vmem:[%s2 + $0x24] sm:$0xf]
  %v430 = vld [vmem:[%s2 + $0x28] sm:$0xf]
  %v431 = vld [vmem:[%s2 + $0x2c] sm:$0xf]
  %v432 = vld [vmem:[%s2 + $0x30] sm:$0xf]
  %v433 = vld [vmem:[%s2 + $0x34] sm:$0xf]
  %v434 = vld [vmem:[%s2 + $0x38] sm:$0xf]
  %v435 = vld [vmem:[%s2 + $0x3c] sm:$0xf]
  %v436 = vld [vmem:[%s3] sm:$0xf]
  %v437 = vld [vmem:[%s3 + $0x4] sm:$0xf]
  %v438 = vld [vmem:[%s3 + $0x8] sm:$0xf]
  %v439 = vld [vmem:[%s3 + $0xc] sm:$0xf]
  %v440 = vld [vmem:[%s3 + $0x10] sm:$0xf]
  %v441 = vld [vmem:[%s3 + $0x14] sm:$0xf]
  %v442 = vld [vmem:[%s3 + $0x18] sm:$0xf]
  %v443 = vld [vmem:[%s3 + $0x1c] sm:$0xf]
  %v444 = vld [vmem:[%s3 + $0x20] sm:$0xf]
  %v445 = vld [vmem:[%s3 + $0x24] sm:$0xf]
  %v446 = vld [vmem:[%s3 + $0x28] sm:$0xf]
  %v447 = vld [vmem:[%s3 + $0x2c] sm:$0xf]
  %v448 = vld [vmem:[%s3 + $0x30] sm:$0xf]
  %v449 = vld [vmem:[%s3 + $0x34] sm:$0xf]
  %v450 = vld [vmem:[%s3 + $0x38] sm:$0xf]
  %v451 = vld [vmem:[%s3 + $0x3c] sm:$0xf]
  %v468 = vunpack.c.l.b16 %v436
  %v469 = vunpack.c.l.b16 %v437
  %v470 = vunpack.c.l.b16 %v438
  %v471 = vunpack.c.l.b16 %v439
  %v472 = vunpack.c.l.b16 %v440
  %v473 = vunpack.c.l.b16 %v441
  %v474 = vunpack.c.l.b16 %v442
  %v475 = vunpack.c.l.b16 %v443
  %v476 = vunpack.c.l.b16 %v444
  %v477 = vunpack.c.l.b16 %v445
  %v478 = vunpack.c.l.b16 %v446
  %v479 = vunpack.c.l.b16 %v447
  %v480 = vunpack.c.l.b16 %v448
  %v481 = vunpack.c.l.b16 %v449
  %v482 = vunpack.c.l.b16 %v450
  %v483 = vunpack.c.l.b16 %v451
  %v484 = vpack.c.b16 %v469, %v468
  %v485 = vpack.c.b16 %v471, %v470
  %v486 = vpack.c.b16 %v473, %v472
  %v487 = vpack.c.b16 %v475, %v474
  %v488 = vpack.c.b16 %v477, %v476
  %v489 = vpack.c.b16 %v479, %v478
  %v490 = vpack.c.b16 %v481, %v480
  %v491 = vpack.c.b16 %v483, %v482
  %500 = vmatprep.subr.bf16.mxu0 0
  %501 = vmatpush1.bf16.msra.mxu0 %v491
  %502 = vmatprep.subr.bf16.mxu0 0
  %503 = vmatpush1.bf16.msra.mxu0 %v490
  %504 = vmatprep.subr.bf16.mxu0 0
  %505 = vmatpush1.bf16.msra.mxu0 %v489
  %506 = vmatprep.subr.bf16.mxu0 0
  %507 = vmatpush1.bf16.msra.mxu0 %v488
  %508 = vmatprep.subr.bf16.mxu0 0
  %509 = vmatpush1.bf16.msra.mxu0 %v487
  %510 = vmatprep.subr.bf16.mxu0 0
  %511 = vmatpush1.bf16.msra.mxu0 %v486
  %512 = vmatprep.subr.bf16.mxu0 0
  %513 = vmatpush1.bf16.msra.mxu0 %v485
  %514 = vmatprep.subr.bf16.mxu0 0
  %515 = vmatpush1.bf16.msra.mxu0 %v484
  %516 = vmatprep.subr.bf16.mxu0 0
  %517 = vmatpush2.bf16.msra.mxu0 0
  %518 = vmatprep.subr.bf16.mxu0 0
  %519 = vmatpush2.bf16.msra.mxu0 0
  %520 = vmatprep.subr.bf16.mxu0 0
  %521 = vmatpush2.bf16.msra.mxu0 0
  %522 = vmatprep.subr.bf16.mxu0 0
  %523 = vmatpush2.bf16.msra.mxu0 0
  %524 = vmatprep.subr.bf16.mxu0 0
  %525 = vmatpush2.bf16.msra.mxu0 0
  %526 = vmatprep.subr.bf16.mxu0 0
  %527 = vmatpush2.bf16.msra.mxu0 0
  %528 = vmatprep.subr.bf16.mxu0 0
  %529 = vmatpush2.bf16.msra.mxu0 0
  %530 = vmatprep.subr.bf16.mxu0 0
  %531 = vmatpush2.bf16.msra.mxu0 0
  %532 = vmatprep.mubr.bf16.mxu0 0
  %533 = vmatmul.mubr.bf16.gmra.mxu0 %v412
  %v534 = vpop.f32.mrf.mxu0
  %v535 = vadd.f32 0.0, %v534
  %v536 = vpop.f32.mrf.mxu0
  %v537 = vpop.f32.mrf.mxu0
  %v538 = vadd.f32 0.0, %v537
  %v539 = vpop.f32.mrf.mxu0
  %540 = vmatprep.mubr.bf16.mxu0 0
  %541 = vmatmul.mubr.bf16.gmra.mxu0 %v413
  %v542 = vpop.f32.mrf.mxu0
  %v543 = vadd.f32 0.0, %v542
  %v544 = vpop.f32.mrf.mxu0
  %v545 = vpop.f32.mrf.mxu0
  %v546 = vadd.f32 0.0, %v545
  %v547 = vpop.f32.mrf.mxu0
  %548 = vmatprep.mubr.bf16.mxu0 0
  %549 = vmatmul.mubr.bf16.gmra.mxu0 %v414
  %v550 = vpop.f32.mrf.mxu0
  %v551 = vadd.f32 0.0, %v550
  %v552 = vpop.f32.mrf.mxu0
  %v553 = vpop.f32.mrf.mxu0
  %v554 = vadd.f32 0.0, %v553
  %v555 = vpop.f32.mrf.mxu0
  %556 = vmatprep.mubr.bf16.mxu0 0
  %557 = vmatmul.mubr.bf16.gmra.mxu0 %v415
  %v558 = vpop.f32.mrf.mxu0
  %v559 = vadd.f32 0.0, %v558
  %v560 = vpop.f32.mrf.mxu0
  %v561 = vpop.f32.mrf.mxu0
  %v562 = vadd.f32 0.0, %v561
  %v563 = vpop.f32.mrf.mxu0
  %564 = vmatprep.mubr.bf16.mxu0 0
  %565 = vmatmul.mubr.bf16.gmra.mxu0 %v416
  %v566 = vpop.f32.mrf.mxu0
  %v567 = vadd.f32 0.0, %v566
  %v568 = vpop.f32.mrf.mxu0
  %v569 = vpop.f32.mrf.mxu0
  %v570 = vadd.f32 0.0, %v569
  %v571 = vpop.f32.mrf.mxu0
  %572 = vmatprep.mubr.bf16.mxu0 0
  %573 = vmatmul.mubr.bf16.gmra.mxu0 %v417
  %v574 = vpop.f32.mrf.mxu0
  %v575 = vadd.f32 0.0, %v574
  %v576 = vpop.f32.mrf.mxu0
  %v577 = vpop.f32.mrf.mxu0
  %v578 = vadd.f32 0.0, %v577
  %v579 = vpop.f32.mrf.mxu0
  %580 = vmatprep.mubr.bf16.mxu0 0
  %581 = vmatmul.mubr.bf16.gmra.mxu0 %v418
  %v582 = vpop.f32.mrf.mxu0
  %v583 = vadd.f32 0.0, %v582
  %v584 = vpop.f32.mrf.mxu0
  %v585 = vpop.f32.mrf.mxu0
  %v586 = vadd.f32 0.0, %v585
  %v587 = vpop.f32.mrf.mxu0
  %588 = vmatprep.mubr.bf16.mxu0 0
  %589 = vmatmul.mubr.bf16.gmra.mxu0 %v419
  %v590 = vpop.f32.mrf.mxu0
  %v591 = vadd.f32 0.0, %v590
  %v592 = vpop.f32.mrf.mxu0
  %v593 = vpop.f32.mrf.mxu0
  %v594 = vadd.f32 0.0, %v593
  %v595 = vpop.f32.mrf.mxu0
  %596 = vdwg.mxu0
  %v613 = vunpack.c.l.b16 %v420
  %v614 = vunpack.c.l.b16 %v421
  %v615 = vunpack.c.l.b16 %v422
  %v616 = vunpack.c.l.b16 %v423
  %v617 = vunpack.c.l.b16 %v424
  %v618 = vunpack.c.l.b16 %v425
  %v619 = vunpack.c.l.b16 %v426
  %v620 = vunpack.c.l.b16 %v427
  %v621 = vunpack.c.l.b16 %v428
  %v622 = vunpack.c.l.b16 %v429
  %v623 = vunpack.c.l.b16 %v430
  %v624 = vunpack.c.l.b16 %v431
  %v625 = vunpack.c.l.b16 %v432
  %v626 = vunpack.c.l.b16 %v433
  %v627 = vunpack.c.l.b16 %v434
  %v628 = vunpack.c.l.b16 %v435
  %v629 = vpack.c.b16 %v614, %v613
  %v630 = vpack.c.b16 %v616, %v615
  %v631 = vpack.c.b16 %v618, %v617
  %v632 = vpack.c.b16 %v620, %v619
  %v633 = vpack.c.b16 %v622, %v621
  %v634 = vpack.c.b16 %v624, %v623
  %v635 = vpack.c.b16 %v626, %v625
  %v636 = vpack.c.b16 %v628, %v627
  %645 = vmatprep.subr.bf16.mxu0 0
  %646 = vmatpush1.bf16.msra.mxu0 %v636
  %647 = vmatprep.subr.bf16.mxu0 0
  %648 = vmatpush1.bf16.msra.mxu0 %v635
  %649 = vmatprep.subr.bf16.mxu0 0
  %650 = vmatpush1.bf16.msra.mxu0 %v634
  %651 = vmatprep.subr.bf16.mxu0 0
  %652 = vmatpush1.bf16.msra.mxu0 %v633
  %653 = vmatprep.subr.bf16.mxu0 0
  %654 = vmatpush1.bf16.msra.mxu0 %v632
  %655 = vmatprep.subr.bf16.mxu0 0
  %656 = vmatpush1.bf16.msra.mxu0 %v631
  %657 = vmatprep.subr.bf16.mxu0 0
  %658 = vmatpush1.bf16.msra.mxu0 %v630
  %659 = vmatprep.subr.bf16.mxu0 0
  %660 = vmatpush1.bf16.msra.mxu0 %v629
  %661 = vmatprep.subr.bf16.mxu0 0
  %662 = vmatpush2.bf16.msra.mxu0 0
  %663 = vmatprep.subr.bf16.mxu0 0
  %664 = vmatpush2.bf16.msra.mxu0 0
  %665 = vmatprep.subr.bf16.mxu0 0
  %666 = vmatpush2.bf16.msra.mxu0 0
  %667 = vmatprep.subr.bf16.mxu0 0
  %668 = vmatpush2.bf16.msra.mxu0 0
  %669 = vmatprep.subr.bf16.mxu0 0
  %670 = vmatpush2.bf16.msra.mxu0 0
  %671 = vmatprep.subr.bf16.mxu0 0
  %672 = vmatpush2.bf16.msra.mxu0 0
  %673 = vmatprep.subr.bf16.mxu0 0
  %674 = vmatpush2.bf16.msra.mxu0 0
  %675 = vmatprep.subr.bf16.mxu0 0
  %676 = vmatpush2.bf16.msra.mxu0 0
  %677 = vmatprep.mubr.bf16.mxu0 0
  %678 = vmatmul.mubr.bf16.gmra.mxu0 %v404
  %v679 = vpop.f32.mrf.mxu0
  %v680 = vadd.f32 %v535, %v679
  %v681 = vpop.f32.mrf.mxu0
  %v682 = vpop.f32.mrf.mxu0
  %v683 = vadd.f32 %v538, %v682
  %v684 = vpop.f32.mrf.mxu0
  %685 = vmatprep.mubr.bf16.mxu0 0
  %686 = vmatmul.mubr.bf16.gmra.mxu0 %v405
  %v687 = vpop.f32.mrf.mxu0
  %v688 = vadd.f32 %v543, %v687
  %v689 = vpop.f32.mrf.mxu0
  %v690 = vpop.f32.mrf.mxu0
  %v691 = vadd.f32 %v546, %v690
  %v692 = vpop.f32.mrf.mxu0
  %693 = vmatprep.mubr.bf16.mxu0 0
  %694 = vmatmul.mubr.bf16.gmra.mxu0 %v406
  %v695 = vpop.f32.mrf.mxu0
  %v696 = vadd.f32 %v551, %v695
  %v697 = vpop.f32.mrf.mxu0
  %v698 = vpop.f32.mrf.mxu0
  %v699 = vadd.f32 %v554, %v698
  %v700 = vpop.f32.mrf.mxu0
  %701 = vmatprep.mubr.bf16.mxu0 0
  %702 = vmatmul.mubr.bf16.gmra.mxu0 %v407
  %v703 = vpop.f32.mrf.mxu0
  %v704 = vadd.f32 %v559, %v703
  %v705 = vpop.f32.mrf.mxu0
  %v706 = vpop.f32.mrf.mxu0
  %v707 = vadd.f32 %v562, %v706
  %v708 = vpop.f32.mrf.mxu0
  %709 = vmatprep.mubr.bf16.mxu0 0
  %710 = vmatmul.mubr.bf16.gmra.mxu0 %v408
  %v711 = vpop.f32.mrf.mxu0
  %v712 = vadd.f32 %v567, %v711
  %v713 = vpop.f32.mrf.mxu0
  %v714 = vpop.f32.mrf.mxu0
  %v715 = vadd.f32 %v570, %v714
  %v716 = vpop.f32.mrf.mxu0
  %717 = vmatprep.mubr.bf16.mxu0 0
  %718 = vmatmul.mubr.bf16.gmra.mxu0 %v409
  %v719 = vpop.f32.mrf.mxu0
  %v720 = vadd.f32 %v575, %v719
  %v721 = vpop.f32.mrf.mxu0
  %v722 = vpop.f32.mrf.mxu0
  %v723 = vadd.f32 %v578, %v722
  %v724 = vpop.f32.mrf.mxu0
  %725 = vmatprep.mubr.bf16.mxu0 0
  %726 = vmatmul.mubr.bf16.gmra.mxu0 %v410
  %v727 = vpop.f32.mrf.mxu0
  %v728 = vadd.f32 %v583, %v727
  %v729 = vpop.f32.mrf.mxu0
  %v730 = vpop.f32.mrf.mxu0
  %v731 = vadd.f32 %v586, %v730
  %v732 = vpop.f32.mrf.mxu0
  %733 = vmatprep.mubr.bf16.mxu0 0
  %734 = vmatmul.mubr.bf16.gmra.mxu0 %v411
  %v735 = vpop.f32.mrf.mxu0
  %v736 = vadd.f32 %v591, %v735
  %v737 = vpop.f32.mrf.mxu0
  %v738 = vpop.f32.mrf.mxu0
  %v739 = vadd.f32 %v594, %v738
  %v740 = vpop.f32.mrf.mxu0
  %741 = vdwg.mxu0
  %v742 = vld [vmem:[%s4] sm:$0x1]
  %v744 = vlaneseq
  %v745 = vshrl.u32 %v744, 7
  %v746 = vsub.s32 0, %v745
  %v747 = vrot.slane %v742, %v746
  %v749 = vadd.f32 %v680, %v747
  %v750 = vadd.f32 %v683, %v747
  %v751 = vadd.f32 %v688, %v747
  %v752 = vadd.f32 %v691, %v747
  %v753 = vadd.f32 %v696, %v747
  %v754 = vadd.f32 %v699, %v747
  %v755 = vadd.f32 %v704, %v747
  %v756 = vadd.f32 %v707, %v747
  %v757 = vadd.f32 %v712, %v747
  %v758 = vadd.f32 %v715, %v747
  %v759 = vadd.f32 %v720, %v747
  %v760 = vadd.f32 %v723, %v747
  %v761 = vadd.f32 %v728, %v747
  %v762 = vadd.f32 %v731, %v747
  %v763 = vadd.f32 %v736, %v747
  %v764 = vadd.f32 %v739, %v747
  %765 = vadd.xlane.f32.xlu0 %v749
  %v766 = vpop.xlane.xlu0 %765
  %767 = vadd.xlane.f32.xlu0 %v750
  %v768 = vpop.xlane.xlu0 %767
  %769 = vadd.xlane.f32.xlu0 %v751
  %v770 = vpop.xlane.xlu0 %769
  %771 = vadd.xlane.f32.xlu0 %v752
  %v772 = vpop.xlane.xlu0 %771
  %773 = vadd.xlane.f32.xlu0 %v753
  %v774 = vpop.xlane.xlu0 %773
  %775 = vadd.xlane.f32.xlu0 %v754
  %v776 = vpop.xlane.xlu0 %775
  %777 = vadd.xlane.f32.xlu0 %v755
  %v778 = vpop.xlane.xlu0 %777
  %779 = vadd.xlane.f32.xlu0 %v756
  %v780 = vpop.xlane.xlu0 %779
  %781 = vadd.xlane.f32.xlu0 %v757
  %v782 = vpop.xlane.xlu0 %781
  %783 = vadd.xlane.f32.xlu0 %v758
  %v784 = vpop.xlane.xlu0 %783
  %785 = vadd.xlane.f32.xlu0 %v759
  %v786 = vpop.xlane.xlu0 %785
  %787 = vadd.xlane.f32.xlu0 %v760
  %v788 = vpop.xlane.xlu0 %787
  %789 = vadd.xlane.f32.xlu0 %v761
  %v790 = vpop.xlane.xlu0 %789
  %791 = vadd.xlane.f32.xlu0 %v762
  %v792 = vpop.xlane.xlu0 %791
  %793 = vadd.xlane.f32.xlu0 %v763
  %v794 = vpop.xlane.xlu0 %793
  %795 = vadd.xlane.f32.xlu0 %v764
  %v796 = vpop.xlane.xlu0 %795
  %v797 = vmul.f32 %v766, 0.03125
  %v798 = vmul.f32 %v768, 0.03125
  %v799 = vmul.f32 %v770, 0.03125
  %v800 = vmul.f32 %v772, 0.03125
  %v801 = vmul.f32 %v774, 0.03125
  %v802 = vmul.f32 %v776, 0.03125
  %v803 = vmul.f32 %v778, 0.03125
  %v804 = vmul.f32 %v780, 0.03125
  %v805 = vmul.f32 %v782, 0.03125
  %v806 = vmul.f32 %v784, 0.03125
  %v807 = vmul.f32 %v786, 0.03125
  %v808 = vmul.f32 %v788, 0.03125
  %v809 = vmul.f32 %v790, 0.03125
  %v810 = vmul.f32 %v792, 0.03125
  %v811 = vmul.f32 %v794, 0.03125
  %v812 = vmul.f32 %v796, 0.03125
  %v813 = vmul.f32 %v749, %v749
  %v814 = vmul.f32 %v750, %v750
  %v815 = vmul.f32 %v751, %v751
  %v816 = vmul.f32 %v752, %v752
  %v817 = vmul.f32 %v753, %v753
  %v818 = vmul.f32 %v754, %v754
  %v819 = vmul.f32 %v755, %v755
  %v820 = vmul.f32 %v756, %v756
  %v821 = vmul.f32 %v757, %v757
  %v822 = vmul.f32 %v758, %v758
  %v823 = vmul.f32 %v759, %v759
  %v824 = vmul.f32 %v760, %v760
  %v825 = vmul.f32 %v761, %v761
  %v826 = vmul.f32 %v762, %v762
  %v827 = vmul.f32 %v763, %v763
  %v828 = vmul.f32 %v764, %v764
  %829 = vadd.xlane.f32.xlu0 %v813
  %v830 = vpop.xlane.xlu0 %829
  %831 = vadd.xlane.f32.xlu0 %v814
  %v832 = vpop.xlane.xlu0 %831
  %833 = vadd.xlane.f32.xlu0 %v815
  %v834 = vpop.xlane.xlu0 %833
  %835 = vadd.xlane.f32.xlu0 %v816
  %v836 = vpop.xlane.xlu0 %835
  %837 = vadd.xlane.f32.xlu0 %v817
  %v838 = vpop.xlane.xlu0 %837
  %839 = vadd.xlane.f32.xlu0 %v818
  %v840 = vpop.xlane.xlu0 %839
  %841 = vadd.xlane.f32.xlu0 %v819
  %v842 = vpop.xlane.xlu0 %841
  %843 = vadd.xlane.f32.xlu0 %v820
  %v844 = vpop.xlane.xlu0 %843
  %845 = vadd.xlane.f32.xlu0 %v821
  %v846 = vpop.xlane.xlu0 %845
  %847 = vadd.xlane.f32.xlu0 %v822
  %v848 = vpop.xlane.xlu0 %847
  %849 = vadd.xlane.f32.xlu0 %v823
  %v850 = vpop.xlane.xlu0 %849
  %851 = vadd.xlane.f32.xlu0 %v824
  %v852 = vpop.xlane.xlu0 %851
  %853 = vadd.xlane.f32.xlu0 %v825
  %v854 = vpop.xlane.xlu0 %853
  %855 = vadd.xlane.f32.xlu0 %v826
  %v856 = vpop.xlane.xlu0 %855
  %857 = vadd.xlane.f32.xlu0 %v827
  %v858 = vpop.xlane.xlu0 %857
  %859 = vadd.xlane.f32.xlu0 %v828
  %v860 = vpop.xlane.xlu0 %859
  %v861 = vmul.f32 %v830, 0.03125
  %v862 = vmul.f32 %v832, 0.03125
  %v863 = vmul.f32 %v834, 0.03125
  %v864 = vmul.f32 %v836, 0.03125
  %v865 = vmul.f32 %v838, 0.03125
  %v866 = vmul.f32 %v840, 0.03125
  %v867 = vmul.f32 %v842, 0.03125
  %v868 = vmul.f32 %v844, 0.03125
  %v869 = vmul.f32 %v846, 0.03125
  %v870 = vmul.f32 %v848, 0.03125
  %v871 = vmul.f32 %v850, 0.03125
  %v872 = vmul.f32 %v852, 0.03125
  %v873 = vmul.f32 %v854, 0.03125
  %v874 = vmul.f32 %v856, 0.03125
  %v875 = vmul.f32 %v858, 0.03125
  %v876 = vmul.f32 %v860, 0.03125
  %v877 = vmul.f32 %v797, %v797
  %v878 = vmul.f32 %v798, %v798
  %v879 = vmul.f32 %v799, %v799
  %v880 = vmul.f32 %v800, %v800
  %v881 = vmul.f32 %v801, %v801
  %v882 = vmul.f32 %v802, %v802
  %v883 = vmul.f32 %v803, %v803
  %v884 = vmul.f32 %v804, %v804
  %v885 = vmul.f32 %v805, %v805
  %v886 = vmul.f32 %v806, %v806
  %v887 = vmul.f32 %v807, %v807
  %v888 = vmul.f32 %v808, %v808
  %v889 = vmul.f32 %v809, %v809
  %v890 = vmul.f32 %v810, %v810
  %v891 = vmul.f32 %v811, %v811
  %v892 = vmul.f32 %v812, %v812
  %v893 = vsub.f32 %v861, %v877
  %v894 = vsub.f32 %v862, %v878
  %v895 = vsub.f32 %v863, %v879
  %v896 = vsub.f32 %v864, %v880
  %v897 = vsub.f32 %v865, %v881
  %v898 = vsub.f32 %v866, %v882
  %v899 = vsub.f32 %v867, %v883
  %v900 = vsub.f32 %v868, %v884
  %v901 = vsub.f32 %v869, %v885
  %v902 = vsub.f32 %v870, %v886
  %v903 = vsub.f32 %v871, %v887
  %v904 = vsub.f32 %v872, %v888
  %v905 = vsub.f32 %v873, %v889
  %v906 = vsub.f32 %v874, %v890
  %v907 = vsub.f32 %v875, %v891
  %v908 = vsub.f32 %v876, %v892
  %v909 = vsub.f32 %v749, %v797
  %v910 = vsub.f32 %v750, %v798
  %v911 = vsub.f32 %v751, %v799
  %v912 = vsub.f32 %v752, %v800
  %v913 = vsub.f32 %v753, %v801
  %v914 = vsub.f32 %v754, %v802
  %v915 = vsub.f32 %v755, %v803
  %v916 = vsub.f32 %v756, %v804
  %v917 = vsub.f32 %v757, %v805
  %v918 = vsub.f32 %v758, %v806
  %v919 = vsub.f32 %v759, %v807
  %v920 = vsub.f32 %v760, %v808
  %v921 = vsub.f32 %v761, %v809
  %v922 = vsub.f32 %v762, %v810
  %v923 = vsub.f32 %v763, %v811
  %v924 = vsub.f32 %v764, %v812
  %v925 = vadd.f32 %v893, 1e-05
  %v926 = vadd.f32 %v894, 1e-05
  %v927 = vadd.f32 %v895, 1e-05
  %v928 = vadd.f32 %v896, 1e-05
  %v929 = vadd.f32 %v897, 1e-05
  %v930 = vadd.f32 %v898, 1e-05
  %v931 = vadd.f32 %v899, 1e-05
  %v932 = vadd.f32 %v900, 1e-05
  %v933 = vadd.f32 %v901, 1e-05
  %v934 = vadd.f32 %v902, 1e-05
  %v935 = vadd.f32 %v903, 1e-05
  %v936 = vadd.f32 %v904, 1e-05
  %v937 = vadd.f32 %v905, 1e-05
  %v938 = vadd.f32 %v906, 1e-05
  %v939 = vadd.f32 %v907, 1e-05
  %v940 = vadd.f32 %v908, 1e-05
  %v941 = vrsqrt.pop %v925
  %v942 = vrsqrt.pop %v926
  %v943 = vrsqrt.pop %v927
  %v944 = vrsqrt.pop %v928
  %v945 = vrsqrt.pop %v929
  %v946 = vrsqrt.pop %v930
  %v947 = vrsqrt.pop %v931
  %v948 = vrsqrt.pop %v932
  %v949 = vrsqrt.pop %v933
  %v950 = vrsqrt.pop %v934
  %v951 = vrsqrt.pop %v935
  %v952 = vrsqrt.pop %v936
  %v953 = vrsqrt.pop %v937
  %v954 = vrsqrt.pop %v938
  %v955 = vrsqrt.pop %v939
  %v956 = vrsqrt.pop %v940
  %v957 = vmul.f32 %v909, %v941
  %v958 = vmul.f32 %v910, %v942
  %v959 = vmul.f32 %v911, %v943
  %v960 = vmul.f32 %v912, %v944
  %v961 = vmul.f32 %v913, %v945
  %v962 = vmul.f32 %v914, %v946
  %v963 = vmul.f32 %v915, %v947
  %v964 = vmul.f32 %v916, %v948
  %v965 = vmul.f32 %v917, %v949
  %v966 = vmul.f32 %v918, %v950
  %v967 = vmul.f32 %v919, %v951
  %v968 = vmul.f32 %v920, %v952
  %v969 = vmul.f32 %v921, %v953
  %v970 = vmul.f32 %v922, %v954
  %v971 = vmul.f32 %v923, %v955
  %v972 = vmul.f32 %v924, %v956
  %v973 = vld [vmem:[%s5] sm:$0x1]
  %v975 = vlaneseq
  %v976 = vshrl.u32 %v975, 7
  %v977 = vsub.s32 0, %v976
  %v978 = vrot.slane %v973, %v977
  %v980 = vmul.f32 %v957, %v978
  %v981 = vmul.f32 %v958, %v978
  %v982 = vmul.f32 %v959, %v978
  %v983 = vmul.f32 %v960, %v978
  %v984 = vmul.f32 %v961, %v978
  %v985 = vmul.f32 %v962, %v978
  %v986 = vmul.f32 %v963, %v978
  %v987 = vmul.f32 %v964, %v978
  %v988 = vmul.f32 %v965, %v978
  %v989 = vmul.f32 %v966, %v978
  %v990 = vmul.f32 %v967, %v978
  %v991 = vmul.f32 %v968, %v978
  %v992 = vmul.f32 %v969, %v978
  %v993 = vmul.f32 %v970, %v978
  %v994 = vmul.f32 %v971, %v978
  %v995 = vmul.f32 %v972, %v978
  %v996 = vld [vmem:[%s6] sm:$0x1]
  %v998 = vlaneseq
  %v999 = vshrl.u32 %v998, 7
  %v1000 = vsub.s32 0, %v999
  %v1001 = vrot.slane %v996, %v1000
  %v1003 = vadd.f32 %v980, %v1001
  %v1004 = vadd.f32 %v981, %v1001
  %v1005 = vadd.f32 %v982, %v1001
  %v1006 = vadd.f32 %v983, %v1001
  %v1007 = vadd.f32 %v984, %v1001
  %v1008 = vadd.f32 %v985, %v1001
  %v1009 = vadd.f32 %v986, %v1001
  %v1010 = vadd.f32 %v987, %v1001
  %v1011 = vadd.f32 %v988, %v1001
  %v1012 = vadd.f32 %v989, %v1001
  %v1013 = vadd.f32 %v990, %v1001
  %v1014 = vadd.f32 %v991, %v1001
  %v1015 = vadd.f32 %v992, %v1001
  %v1016 = vadd.f32 %v993, %v1001
  %v1017 = vadd.f32 %v994, %v1001
  %v1018 = vadd.f32 %v995, %v1001
  %v1019 = vmax.f32 %v1003, 0.0
  %v1020 = vmax.f32 %v1004, 0.0
  %v1021 = vmax.f32 %v1005, 0.0
  %v1022 = vmax.f32 %v1006, 0.0
  %v1023 = vmax.f32 %v1007, 0.0
  %v1024 = vmax.f32 %v1008, 0.0
  %v1025 = vmax.f32 %v1009, 0.0
  %v1026 = vmax.f32 %v1010, 0.0
  %v1027 = vmax.f32 %v1011, 0.0
  %v1028 = vmax.f32 %v1012, 0.0
  %v1029 = vmax.f32 %v1013, 0.0
  %v1030 = vmax.f32 %v1014, 0.0
  %v1031 = vmax.f32 %v1015, 0.0
  %v1032 = vmax.f32 %v1016, 0.0
  %v1033 = vmax.f32 %v1017, 0.0
  %v1034 = vmax.f32 %v1018, 0.0
  %v1035 = vpack.c.bf16 %v1020, %v1019
  %v1036 = vpack.c.bf16 %v1022, %v1021
  %v1037 = vpack.c.bf16 %v1024, %v1023
  %v1038 = vpack.c.bf16 %v1026, %v1025
  %v1039 = vpack.c.bf16 %v1028, %v1027
  %v1040 = vpack.c.bf16 %v1030, %v1029
  %v1041 = vpack.c.bf16 %v1032, %v1031
  %v1042 = vpack.c.bf16 %v1034, %v1033
  %v1043 = vld [vmem:[%s7] sm:$0xf]
  %v1044 = vld [vmem:[%s7 + $0x4] sm:$0xf]
  %v1045 = vld [vmem:[%s7 + $0x8] sm:$0xf]
  %v1046 = vld [vmem:[%s7 + $0xc] sm:$0xf]
  %v1047 = vld [vmem:[%s7 + $0x10] sm:$0xf]
  %v1048 = vld [vmem:[%s7 + $0x14] sm:$0xf]
  %v1049 = vld [vmem:[%s7 + $0x18] sm:$0xf]
  %v1050 = vld [vmem:[%s7 + $0x1c] sm:$0xf]
  %v1051 = vld [vmem:[%s7 + $0x20] sm:$0xf]
  %v1052 = vld [vmem:[%s7 + $0x24] sm:$0xf]
  %v1053 = vld [vmem:[%s7 + $0x28] sm:$0xf]
  %v1054 = vld [vmem:[%s7 + $0x2c] sm:$0xf]
  %v1055 = vld [vmem:[%s7 + $0x30] sm:$0xf]
  %v1056 = vld [vmem:[%s7 + $0x34] sm:$0xf]
  %v1057 = vld [vmem:[%s7 + $0x38] sm:$0xf]
  %v1058 = vld [vmem:[%s7 + $0x3c] sm:$0xf]
  %v1059 = vld [vmem:[%s7 + $0x40] sm:$0xf]
  %v1060 = vld [vmem:[%s7 + $0x44] sm:$0xf]
  %v1061 = vld [vmem:[%s7 + $0x48] sm:$0xf]
  %v1062 = vld [vmem:[%s7 + $0x4c] sm:$0xf]
  %v1063 = vld [vmem:[%s7 + $0x50] sm:$0xf]
  %v1064 = vld [vmem:[%s7 + $0x54] sm:$0xf]
  %v1065 = vld [vmem:[%s7 + $0x58] sm:$0xf]
  %v1066 = vld [vmem:[%s7 + $0x5c] sm:$0xf]
  %v1067 = vld [vmem:[%s7 + $0x60] sm:$0xf]
  %v1068 = vld [vmem:[%s7 + $0x64] sm:$0xf]
  %v1069 = vld [vmem:[%s7 + $0x68] sm:$0xf]
  %v1070 = vld [vmem:[%s7 + $0x6c] sm:$0xf]
  %v1071 = vld [vmem:[%s7 + $0x70] sm:$0xf]
  %v1072 = vld [vmem:[%s7 + $0x74] sm:$0xf]
  %v1073 = vld [vmem:[%s7 + $0x78] sm:$0xf]
  %v1074 = vld [vmem:[%s7 + $0x7c] sm:$0xf]
  %v1107 = vunpack.c.l.b16 %v1043
  %v1108 = vunpack.c.l.b16 %v1044
  %v1109 = vunpack.c.l.b16 %v1045
  %v1110 = vunpack.c.l.b16 %v1046
  %v1111 = vunpack.c.l.b16 %v1047
  %v1112 = vunpack.c.l.b16 %v1048
  %v1113 = vunpack.c.l.b16 %v1049
  %v1114 = vunpack.c.l.b16 %v1050
  %v1115 = vunpack.c.l.b16 %v1051
  %v1116 = vunpack.c.l.b16 %v1052
  %v1117 = vunpack.c.l.b16 %v1053
  %v1118 = vunpack.c.l.b16 %v1054
  %v1119 = vunpack.c.l.b16 %v1055
  %v1120 = vunpack.c.l.b16 %v1056
  %v1121 = vunpack.c.l.b16 %v1057
  %v1122 = vunpack.c.l.b16 %v1058
  %v1123 = vunpack.c.l.b16 %v1059
  %v1124 = vunpack.c.l.b16 %v1060
  %v1125 = vunpack.c.l.b16 %v1061
  %v1126 = vunpack.c.l.b16 %v1062
  %v1127 = vunpack.c.l.b16 %v1063
  %v1128 = vunpack.c.l.b16 %v1064
  %v1129 = vunpack.c.l.b16 %v1065
  %v1130 = vunpack.c.l.b16 %v1066
  %v1131 = vunpack.c.l.b16 %v1067
  %v1132 = vunpack.c.l.b16 %v1068
  %v1133 = vunpack.c.l.b16 %v1069
  %v1134 = vunpack.c.l.b16 %v1070
  %v1135 = vunpack.c.l.b16 %v1071
  %v1136 = vunpack.c.l.b16 %v1072
  %v1137 = vunpack.c.l.b16 %v1073
  %v1138 = vunpack.c.l.b16 %v1074
  %v1139 = vpack.c.b16 %v1108, %v1107
  %v1140 = vpack.c.b16 %v1110, %v1109
  %v1141 = vpack.c.b16 %v1112, %v1111
  %v1142 = vpack.c.b16 %v1114, %v1113
  %v1143 = vpack.c.b16 %v1116, %v1115
  %v1144 = vpack.c.b16 %v1118, %v1117
  %v1145 = vpack.c.b16 %v1120, %v1119
  %v1146 = vpack.c.b16 %v1122, %v1121
  %v1147 = vpack.c.b16 %v1124, %v1123
  %v1148 = vpack.c.b16 %v1126, %v1125
  %v1149 = vpack.c.b16 %v1128, %v1127
  %v1150 = vpack.c.b16 %v1130, %v1129
  %v1151 = vpack.c.b16 %v1132, %v1131
  %v1152 = vpack.c.b16 %v1134, %v1133
  %v1153 = vpack.c.b16 %v1136, %v1135
  %v1154 = vpack.c.b16 %v1138, %v1137
  %1171 = vmatprep.subr.bf16.mxu0 0
  %1172 = vmatpush1.bf16.msra.mxu0 %v1042
  %1173 = vmatprep.subr.bf16.mxu0 0
  %1174 = vmatpush1.bf16.msra.mxu0 %v1041
  %1175 = vmatprep.subr.bf16.mxu0 0
  %1176 = vmatpush1.bf16.msra.mxu0 %v1040
  %1177 = vmatprep.subr.bf16.mxu0 0
  %1178 = vmatpush1.bf16.msra.mxu0 %v1039
  %1179 = vmatprep.subr.bf16.mxu0 0
  %1180 = vmatpush1.bf16.msra.mxu0 %v1038
  %1181 = vmatprep.subr.bf16.mxu0 0
  %1182 = vmatpush1.bf16.msra.mxu0 %v1037
  %1183 = vmatprep.subr.bf16.mxu0 0
  %1184 = vmatpush1.bf16.msra.mxu0 %v1036
  %1185 = vmatprep.subr.bf16.mxu0 0
  %1186 = vmatpush1.bf16.msra.mxu0 %v1035
  %1187 = vmatprep.subr.bf16.mxu0 0
  %1188 = vmatpush2.bf16.msra.mxu0 0
  %1189 = vmatprep.subr.bf16.mxu0 0
  %1190 = vmatpush2.bf16.msra.mxu0 0
  %1191 = vmatprep.subr.bf16.mxu0 0
  %1192 = vmatpush2.bf16.msra.mxu0 0
  %1193 = vmatprep.subr.bf16.mxu0 0
  %1194 = vmatpush2.bf16.msra.mxu0 0
  %1195 = vmatprep.subr.bf16.mxu0 0
  %1196 = vmatpush2.bf16.msra.mxu0 0
  %1197 = vmatprep.subr.bf16.mxu0 0
  %1198 = vmatpush2.bf16.msra.mxu0 0
  %1199 = vmatprep.subr.bf16.mxu0 0
  %1200 = vmatpush2.bf16.msra.mxu0 0
  %1201 = vmatprep.subr.bf16.mxu0 0
  %1202 = vmatpush2.bf16.msra.mxu0 0
  %1203 = vmatprep.mubr.bf16.mxu0 0
  %1204 = vmatmul.mubr.bf16.gmra.mxu0 %v1139
  %v1205 = vpop.f32.mrf.mxu0
  %v1206 = vadd.f32 0.0, %v1205
  %v1207 = vpop.f32.mrf.mxu0
  %v1208 = vpop.f32.mrf.mxu0
  %v1209 = vadd.f32 0.0, %v1208
  %v1210 = vpop.f32.mrf.mxu0
  %1211 = vmatprep.mubr.bf16.mxu0 0
  %1212 = vmatmul.mubr.bf16.gmra.mxu0 %v1140
  %v1213 = vpop.f32.mrf.mxu0
  %v1214 = vadd.f32 0.0, %v1213
  %v1215 = vpop.f32.mrf.mxu0
  %v1216 = vpop.f32.mrf.mxu0
  %v1217 = vadd.f32 0.0, %v1216
  %v1218 = vpop.f32.mrf.mxu0
  %1219 = vmatprep.mubr.bf16.mxu0 0
  %1220 = vmatmul.mubr.bf16.gmra.mxu0 %v1141
  %v1221 = vpop.f32.mrf.mxu0
  %v1222 = vadd.f32 0.0, %v1221
  %v1223 = vpop.f32.mrf.mxu0
  %v1224 = vpop.f32.mrf.mxu0
  %v1225 = vadd.f32 0.0, %v1224
  %v1226 = vpop.f32.mrf.mxu0
  %1227 = vmatprep.mubr.bf16.mxu0 0
  %1228 = vmatmul.mubr.bf16.gmra.mxu0 %v1142
  %v1229 = vpop.f32.mrf.mxu0
  %v1230 = vadd.f32 0.0, %v1229
  %v1231 = vpop.f32.mrf.mxu0
  %v1232 = vpop.f32.mrf.mxu0
  %v1233 = vadd.f32 0.0, %v1232
  %v1234 = vpop.f32.mrf.mxu0
  %1235 = vmatprep.mubr.bf16.mxu0 0
  %1236 = vmatmul.mubr.bf16.gmra.mxu0 %v1143
  %v1237 = vpop.f32.mrf.mxu0
  %v1238 = vadd.f32 0.0, %v1237
  %v1239 = vpop.f32.mrf.mxu0
  %v1240 = vpop.f32.mrf.mxu0
  %v1241 = vadd.f32 0.0, %v1240
  %v1242 = vpop.f32.mrf.mxu0
  %1243 = vmatprep.mubr.bf16.mxu0 0
  %1244 = vmatmul.mubr.bf16.gmra.mxu0 %v1144
  %v1245 = vpop.f32.mrf.mxu0
  %v1246 = vadd.f32 0.0, %v1245
  %v1247 = vpop.f32.mrf.mxu0
  %v1248 = vpop.f32.mrf.mxu0
  %v1249 = vadd.f32 0.0, %v1248
  %v1250 = vpop.f32.mrf.mxu0
  %1251 = vmatprep.mubr.bf16.mxu0 0
  %1252 = vmatmul.mubr.bf16.gmra.mxu0 %v1145
  %v1253 = vpop.f32.mrf.mxu0
  %v1254 = vadd.f32 0.0, %v1253
  %v1255 = vpop.f32.mrf.mxu0
  %v1256 = vpop.f32.mrf.mxu0
  %v1257 = vadd.f32 0.0, %v1256
  %v1258 = vpop.f32.mrf.mxu0
  %1259 = vmatprep.mubr.bf16.mxu0 0
  %1260 = vmatmul.mubr.bf16.gmra.mxu0 %v1146
  %v1261 = vpop.f32.mrf.mxu0
  %v1262 = vadd.f32 0.0, %v1261
  %v1263 = vpop.f32.mrf.mxu0
  %v1264 = vpop.f32.mrf.mxu0
  %v1265 = vadd.f32 0.0, %v1264
  %v1266 = vpop.f32.mrf.mxu0
  %1267 = vmatprep.mubr.bf16.mxu0 0
  %1268 = vmatmul.mubr.bf16.gmra.mxu0 %v1147
  %v1269 = vpop.f32.mrf.mxu0
  %v1270 = vadd.f32 0.0, %v1269
  %v1271 = vpop.f32.mrf.mxu0
  %v1272 = vpop.f32.mrf.mxu0
  %v1273 = vadd.f32 0.0, %v1272
  %v1274 = vpop.f32.mrf.mxu0
  %1275 = vmatprep.mubr.bf16.mxu0 0
  %1276 = vmatmul.mubr.bf16.gmra.mxu0 %v1148
  %v1277 = vpop.f32.mrf.mxu0
  %v1278 = vadd.f32 0.0, %v1277
  %v1279 = vpop.f32.mrf.mxu0
  %v1280 = vpop.f32.mrf.mxu0
  %v1281 = vadd.f32 0.0, %v1280
  %v1282 = vpop.f32.mrf.mxu0
  %1283 = vmatprep.mubr.bf16.mxu0 0
  %1284 = vmatmul.mubr.bf16.gmra.mxu0 %v1149
  %v1285 = vpop.f32.mrf.mxu0
  %v1286 = vadd.f32 0.0, %v1285
  %v1287 = vpop.f32.mrf.mxu0
  %v1288 = vpop.f32.mrf.mxu0
  %v1289 = vadd.f32 0.0, %v1288
  %v1290 = vpop.f32.mrf.mxu0
  %1291 = vmatprep.mubr.bf16.mxu0 0
  %1292 = vmatmul.mubr.bf16.gmra.mxu0 %v1150
  %v1293 = vpop.f32.mrf.mxu0
  %v1294 = vadd.f32 0.0, %v1293
  %v1295 = vpop.f32.mrf.mxu0
  %v1296 = vpop.f32.mrf.mxu0
  %v1297 = vadd.f32 0.0, %v1296
  %v1298 = vpop.f32.mrf.mxu0
  %1299 = vmatprep.mubr.bf16.mxu0 0
  %1300 = vmatmul.mubr.bf16.gmra.mxu0 %v1151
  %v1301 = vpop.f32.mrf.mxu0
  %v1302 = vadd.f32 0.0, %v1301
  %v1303 = vpop.f32.mrf.mxu0
  %v1304 = vpop.f32.mrf.mxu0
  %v1305 = vadd.f32 0.0, %v1304
  %v1306 = vpop.f32.mrf.mxu0
  %1307 = vmatprep.mubr.bf16.mxu0 0
  %1308 = vmatmul.mubr.bf16.gmra.mxu0 %v1152
  %v1309 = vpop.f32.mrf.mxu0
  %v1310 = vadd.f32 0.0, %v1309
  %v1311 = vpop.f32.mrf.mxu0
  %v1312 = vpop.f32.mrf.mxu0
  %v1313 = vadd.f32 0.0, %v1312
  %v1314 = vpop.f32.mrf.mxu0
  %1315 = vmatprep.mubr.bf16.mxu0 0
  %1316 = vmatmul.mubr.bf16.gmra.mxu0 %v1153
  %v1317 = vpop.f32.mrf.mxu0
  %v1318 = vadd.f32 0.0, %v1317
  %v1319 = vpop.f32.mrf.mxu0
  %v1320 = vpop.f32.mrf.mxu0
  %v1321 = vadd.f32 0.0, %v1320
  %v1322 = vpop.f32.mrf.mxu0
  %1323 = vmatprep.mubr.bf16.mxu0 0
  %1324 = vmatmul.mubr.bf16.gmra.mxu0 %v1154
  %v1325 = vpop.f32.mrf.mxu0
  %v1326 = vadd.f32 0.0, %v1325
  %v1327 = vpop.f32.mrf.mxu0
  %v1328 = vpop.f32.mrf.mxu0
  %v1329 = vadd.f32 0.0, %v1328
  %v1330 = vpop.f32.mrf.mxu0
  %1331 = vdwg.mxu0
  %v1332 = vpack.c.bf16 %v1209, %v1206
  %v1333 = vpack.c.bf16 %v1217, %v1214
  %v1334 = vpack.c.bf16 %v1225, %v1222
  %v1335 = vpack.c.bf16 %v1233, %v1230
  %v1336 = vpack.c.bf16 %v1241, %v1238
  %v1337 = vpack.c.bf16 %v1249, %v1246
  %v1338 = vpack.c.bf16 %v1257, %v1254
  %v1339 = vpack.c.bf16 %v1265, %v1262
  %v1340 = vpack.c.bf16 %v1273, %v1270
  %v1341 = vpack.c.bf16 %v1281, %v1278
  %v1342 = vpack.c.bf16 %v1289, %v1286
  %v1343 = vpack.c.bf16 %v1297, %v1294
  %v1344 = vpack.c.bf16 %v1305, %v1302
  %v1345 = vpack.c.bf16 %v1313, %v1310
  %v1346 = vpack.c.bf16 %v1321, %v1318
  %v1347 = vpack.c.bf16 %v1329, %v1326
  %v1348 = vld [vmem:[%s8] sm:$0xf]
  %v1349 = vld [vmem:[%s8 + $0x4] sm:$0xf]
  %v1350 = vld [vmem:[%s8 + $0x8] sm:$0xf]
  %v1351 = vld [vmem:[%s8 + $0xc] sm:$0xf]
  %v1352 = vld [vmem:[%s8 + $0x10] sm:$0xf]
  %v1353 = vld [vmem:[%s8 + $0x14] sm:$0xf]
  %v1354 = vld [vmem:[%s8 + $0x18] sm:$0xf]
  %v1355 = vld [vmem:[%s8 + $0x1c] sm:$0xf]
  %v1356 = vld [vmem:[%s8 + $0x20] sm:$0xf]
  %v1357 = vld [vmem:[%s8 + $0x24] sm:$0xf]
  %v1358 = vld [vmem:[%s8 + $0x28] sm:$0xf]
  %v1359 = vld [vmem:[%s8 + $0x2c] sm:$0xf]
  %v1360 = vld [vmem:[%s8 + $0x30] sm:$0xf]
  %v1361 = vld [vmem:[%s8 + $0x34] sm:$0xf]
  %v1362 = vld [vmem:[%s8 + $0x38] sm:$0xf]
  %v1363 = vld [vmem:[%s8 + $0x3c] sm:$0xf]
  %v1364 = vld [vmem:[%s9] sm:$0xf]
  %v1365 = vld [vmem:[%s9 + $0x4] sm:$0xf]
  %v1366 = vld [vmem:[%s9 + $0x8] sm:$0xf]
  %v1367 = vld [vmem:[%s9 + $0xc] sm:$0xf]
  %v1368 = vld [vmem:[%s9 + $0x10] sm:$0xf]
  %v1369 = vld [vmem:[%s9 + $0x14] sm:$0xf]
  %v1370 = vld [vmem:[%s9 + $0x18] sm:$0xf]
  %v1371 = vld [vmem:[%s9 + $0x1c] sm:$0xf]
  %v1372 = vld [vmem:[%s9 + $0x20] sm:$0xf]
  %v1373 = vld [vmem:[%s9 + $0x24] sm:$0xf]
  %v1374 = vld [vmem:[%s9 + $0x28] sm:$0xf]
  %v1375 = vld [vmem:[%s9 + $0x2c] sm:$0xf]
  %v1376 = vld [vmem:[%s9 + $0x30] sm:$0xf]
  %v1377 = vld [vmem:[%s9 + $0x34] sm:$0xf]
  %v1378 = vld [vmem:[%s9 + $0x38] sm:$0xf]
  %v1379 = vld [vmem:[%s9 + $0x3c] sm:$0xf]
  %v1396 = vunpack.c.l.b16 %v1364
  %v1397 = vunpack.c.l.b16 %v1365
  %v1398 = vunpack.c.l.b16 %v1366
  %v1399 = vunpack.c.l.b16 %v1367
  %v1400 = vunpack.c.l.b16 %v1368
  %v1401 = vunpack.c.l.b16 %v1369
  %v1402 = vunpack.c.l.b16 %v1370
  %v1403 = vunpack.c.l.b16 %v1371
  %v1404 = vunpack.c.l.b16 %v1372
  %v1405 = vunpack.c.l.b16 %v1373
  %v1406 = vunpack.c.l.b16 %v1374
  %v1407 = vunpack.c.l.b16 %v1375
  %v1408 = vunpack.c.l.b16 %v1376
  %v1409 = vunpack.c.l.b16 %v1377
  %v1410 = vunpack.c.l.b16 %v1378
  %v1411 = vunpack.c.l.b16 %v1379
  %v1412 = vpack.c.b16 %v1397, %v1396
  %v1413 = vpack.c.b16 %v1399, %v1398
  %v1414 = vpack.c.b16 %v1401, %v1400
  %v1415 = vpack.c.b16 %v1403, %v1402
  %v1416 = vpack.c.b16 %v1405, %v1404
  %v1417 = vpack.c.b16 %v1407, %v1406
  %v1418 = vpack.c.b16 %v1409, %v1408
  %v1419 = vpack.c.b16 %v1411, %v1410
  %1428 = vmatprep.subr.bf16.mxu0 0
  %1429 = vmatpush1.bf16.msra.mxu0 %v1419
  %1430 = vmatprep.subr.bf16.mxu0 0
  %1431 = vmatpush1.bf16.msra.mxu0 %v1418
  %1432 = vmatprep.subr.bf16.mxu0 0
  %1433 = vmatpush1.bf16.msra.mxu0 %v1417
  %1434 = vmatprep.subr.bf16.mxu0 0
  %1435 = vmatpush1.bf16.msra.mxu0 %v1416
  %1436 = vmatprep.subr.bf16.mxu0 0
  %1437 = vmatpush1.bf16.msra.mxu0 %v1415
  %1438 = vmatprep.subr.bf16.mxu0 0
  %1439 = vmatpush1.bf16.msra.mxu0 %v1414
  %1440 = vmatprep.subr.bf16.mxu0 0
  %1441 = vmatpush1.bf16.msra.mxu0 %v1413
  %1442 = vmatprep.subr.bf16.mxu0 0
  %1443 = vmatpush1.bf16.msra.mxu0 %v1412
  %1444 = vmatprep.subr.bf16.mxu0 0
  %1445 = vmatpush2.bf16.msra.mxu0 0
  %1446 = vmatprep.subr.bf16.mxu0 0
  %1447 = vmatpush2.bf16.msra.mxu0 0
  %1448 = vmatprep.subr.bf16.mxu0 0
  %1449 = vmatpush2.bf16.msra.mxu0 0
  %1450 = vmatprep.subr.bf16.mxu0 0
  %1451 = vmatpush2.bf16.msra.mxu0 0
  %1452 = vmatprep.subr.bf16.mxu0 0
  %1453 = vmatpush2.bf16.msra.mxu0 0
  %1454 = vmatprep.subr.bf16.mxu0 0
  %1455 = vmatpush2.bf16.msra.mxu0 0
  %1456 = vmatprep.subr.bf16.mxu0 0
  %1457 = vmatpush2.bf16.msra.mxu0 0
  %1458 = vmatprep.subr.bf16.mxu0 0
  %1459 = vmatpush2.bf16.msra.mxu0 0
  %1460 = vmatprep.mubr.bf16.mxu0 0
  %1461 = vmatmul.mubr.bf16.gmra.mxu0 %v1340
  %v1462 = vpop.f32.mrf.mxu0
  %v1463 = vadd.f32 0.0, %v1462
  %v1464 = vpop.f32.mrf.mxu0
  %v1465 = vpop.f32.mrf.mxu0
  %v1466 = vadd.f32 0.0, %v1465
  %v1467 = vpop.f32.mrf.mxu0
  %1468 = vmatprep.mubr.bf16.mxu0 0
  %1469 = vmatmul.mubr.bf16.gmra.mxu0 %v1341
  %v1470 = vpop.f32.mrf.mxu0
  %v1471 = vadd.f32 0.0, %v1470
  %v1472 = vpop.f32.mrf.mxu0
  %v1473 = vpop.f32.mrf.mxu0
  %v1474 = vadd.f32 0.0, %v1473
  %v1475 = vpop.f32.mrf.mxu0
  %1476 = vmatprep.mubr.bf16.mxu0 0
  %1477 = vmatmul.mubr.bf16.gmra.mxu0 %v1342
  %v1478 = vpop.f32.mrf.mxu0
  %v1479 = vadd.f32 0.0, %v1478
  %v1480 = vpop.f32.mrf.mxu0
  %v1481 = vpop.f32.mrf.mxu0
  %v1482 = vadd.f32 0.0, %v1481
  %v1483 = vpop.f32.mrf.mxu0
  %1484 = vmatprep.mubr.bf16.mxu0 0
  %1485 = vmatmul.mubr.bf16.gmra.mxu0 %v1343
  %v1486 = vpop.f32.mrf.mxu0
  %v1487 = vadd.f32 0.0, %v1486
  %v1488 = vpop.f32.mrf.mxu0
  %v1489 = vpop.f32.mrf.mxu0
  %v1490 = vadd.f32 0.0, %v1489
  %v1491 = vpop.f32.mrf.mxu0
  %1492 = vmatprep.mubr.bf16.mxu0 0
  %1493 = vmatmul.mubr.bf16.gmra.mxu0 %v1344
  %v1494 = vpop.f32.mrf.mxu0
  %v1495 = vadd.f32 0.0, %v1494
  %v1496 = vpop.f32.mrf.mxu0
  %v1497 = vpop.f32.mrf.mxu0
  %v1498 = vadd.f32 0.0, %v1497
  %v1499 = vpop.f32.mrf.mxu0
  %1500 = vmatprep.mubr.bf16.mxu0 0
  %1501 = vmatmul.mubr.bf16.gmra.mxu0 %v1345
  %v1502 = vpop.f32.mrf.mxu0
  %v1503 = vadd.f32 0.0, %v1502
  %v1504 = vpop.f32.mrf.mxu0
  %v1505 = vpop.f32.mrf.mxu0
  %v1506 = vadd.f32 0.0, %v1505
  %v1507 = vpop.f32.mrf.mxu0
  %1508 = vmatprep.mubr.bf16.mxu0 0
  %1509 = vmatmul.mubr.bf16.gmra.mxu0 %v1346
  %v1510 = vpop.f32.mrf.mxu0
  %v1511 = vadd.f32 0.0, %v1510
  %v1512 = vpop.f32.mrf.mxu0
  %v1513 = vpop.f32.mrf.mxu0
  %v1514 = vadd.f32 0.0, %v1513
  %v1515 = vpop.f32.mrf.mxu0
  %1516 = vmatprep.mubr.bf16.mxu0 0
  %1517 = vmatmul.mubr.bf16.gmra.mxu0 %v1347
  %v1518 = vpop.f32.mrf.mxu0
  %v1519 = vadd.f32 0.0, %v1518
  %v1520 = vpop.f32.mrf.mxu0
  %v1521 = vpop.f32.mrf.mxu0
  %v1522 = vadd.f32 0.0, %v1521
  %v1523 = vpop.f32.mrf.mxu0
  %1524 = vdwg.mxu0
  %v1541 = vunpack.c.l.b16 %v1348
  %v1542 = vunpack.c.l.b16 %v1349
  %v1543 = vunpack.c.l.b16 %v1350
  %v1544 = vunpack.c.l.b16 %v1351
  %v1545 = vunpack.c.l.b16 %v1352
  %v1546 = vunpack.c.l.b16 %v1353
  %v1547 = vunpack.c.l.b16 %v1354
  %v1548 = vunpack.c.l.b16 %v1355
  %v1549 = vunpack.c.l.b16 %v1356
  %v1550 = vunpack.c.l.b16 %v1357
  %v1551 = vunpack.c.l.b16 %v1358
  %v1552 = vunpack.c.l.b16 %v1359
  %v1553 = vunpack.c.l.b16 %v1360
  %v1554 = vunpack.c.l.b16 %v1361
  %v1555 = vunpack.c.l.b16 %v1362
  %v1556 = vunpack.c.l.b16 %v1363
  %v1557 = vpack.c.b16 %v1542, %v1541
  %v1558 = vpack.c.b16 %v1544, %v1543
  %v1559 = vpack.c.b16 %v1546, %v1545
  %v1560 = vpack.c.b16 %v1548, %v1547
  %v1561 = vpack.c.b16 %v1550, %v1549
  %v1562 = vpack.c.b16 %v1552, %v1551
  %v1563 = vpack.c.b16 %v1554, %v1553
  %v1564 = vpack.c.b16 %v1556, %v1555
  %1573 = vmatprep.subr.bf16.mxu0 0
  %1574 = vmatpush1.bf16.msra.mxu0 %v1564
  %1575 = vmatprep.subr.bf16.mxu0 0
  %1576 = vmatpush1.bf16.msra.mxu0 %v1563
  %1577 = vmatprep.subr.bf16.mxu0 0
  %1578 = vmatpush1.bf16.msra.mxu0 %v1562
  %1579 = vmatprep.subr.bf16.mxu0 0
  %1580 = vmatpush1.bf16.msra.mxu0 %v1561
  %1581 = vmatprep.subr.bf16.mxu0 0
  %1582 = vmatpush1.bf16.msra.mxu0 %v1560
  %1583 = vmatprep.subr.bf16.mxu0 0
  %1584 = vmatpush1.bf16.msra.mxu0 %v1559
  %1585 = vmatprep.subr.bf16.mxu0 0
  %1586 = vmatpush1.bf16.msra.mxu0 %v1558
  %1587 = vmatprep.subr.bf16.mxu0 0
  %1588 = vmatpush1.bf16.msra.mxu0 %v1557
  %1589 = vmatprep.subr.bf16.mxu0 0
  %1590 = vmatpush2.bf16.msra.mxu0 0
  %1591 = vmatprep.subr.bf16.mxu0 0
  %1592 = vmatpush2.bf16.msra.mxu0 0
  %1593 = vmatprep.subr.bf16.mxu0 0
  %1594 = vmatpush2.bf16.msra.mxu0 0
  %1595 = vmatprep.subr.bf16.mxu0 0
  %1596 = vmatpush2.bf16.msra.mxu0 0
  %1597 = vmatprep.subr.bf16.mxu0 0
  %1598 = vmatpush2.bf16.msra.mxu0 0
  %1599 = vmatprep.subr.bf16.mxu0 0
  %1600 = vmatpush2.bf16.msra.mxu0 0
  %1601 = vmatprep.subr.bf16.mxu0 0
  %1602 = vmatpush2.bf16.msra.mxu0 0
  %1603 = vmatprep.subr.bf16.mxu0 0
  %1604 = vmatpush2.bf16.msra.mxu0 0
  %1605 = vmatprep.mubr.bf16.mxu0 0
  %1606 = vmatmul.mubr.bf16.gmra.mxu0 %v1332
  %v1607 = vpop.f32.mrf.mxu0
  %v1608 = vadd.f32 %v1463, %v1607
  %v1609 = vpop.f32.mrf.mxu0
  %v1610 = vpop.f32.mrf.mxu0
  %v1611 = vadd.f32 %v1466, %v1610
  %v1612 = vpop.f32.mrf.mxu0
  %1613 = vmatprep.mubr.bf16.mxu0 0
  %1614 = vmatmul.mubr.bf16.gmra.mxu0 %v1333
  %v1615 = vpop.f32.mrf.mxu0
  %v1616 = vadd.f32 %v1471, %v1615
  %v1617 = vpop.f32.mrf.mxu0
  %v1618 = vpop.f32.mrf.mxu0
  %v1619 = vadd.f32 %v1474, %v1618
  %v1620 = vpop.f32.mrf.mxu0
  %1621 = vmatprep.mubr.bf16.mxu0 0
  %1622 = vmatmul.mubr.bf16.gmra.mxu0 %v1334
  %v1623 = vpop.f32.mrf.mxu0
  %v1624 = vadd.f32 %v1479, %v1623
  %v1625 = vpop.f32.mrf.mxu0
  %v1626 = vpop.f32.mrf.mxu0
  %v1627 = vadd.f32 %v1482, %v1626
  %v1628 = vpop.f32.mrf.mxu0
  %1629 = vmatprep.mubr.bf16.mxu0 0
  %1630 = vmatmul.mubr.bf16.gmra.mxu0 %v1335
  %v1631 = vpop.f32.mrf.mxu0
  %v1632 = vadd.f32 %v1487, %v1631
  %v1633 = vpop.f32.mrf.mxu0
  %v1634 = vpop.f32.mrf.mxu0
  %v1635 = vadd.f32 %v1490, %v1634
  %v1636 = vpop.f32.mrf.mxu0
  %1637 = vmatprep.mubr.bf16.mxu0 0
  %1638 = vmatmul.mubr.bf16.gmra.mxu0 %v1336
  %v1639 = vpop.f32.mrf.mxu0
  %v1640 = vadd.f32 %v1495, %v1639
  %v1641 = vpop.f32.mrf.mxu0
  %v1642 = vpop.f32.mrf.mxu0
  %v1643 = vadd.f32 %v1498, %v1642
  %v1644 = vpop.f32.mrf.mxu0
  %1645 = vmatprep.mubr.bf16.mxu0 0
  %1646 = vmatmul.mubr.bf16.gmra.mxu0 %v1337
  %v1647 = vpop.f32.mrf.mxu0
  %v1648 = vadd.f32 %v1503, %v1647
  %v1649 = vpop.f32.mrf.mxu0
  %v1650 = vpop.f32.mrf.mxu0
  %v1651 = vadd.f32 %v1506, %v1650
  %v1652 = vpop.f32.mrf.mxu0
  %1653 = vmatprep.mubr.bf16.mxu0 0
  %1654 = vmatmul.mubr.bf16.gmra.mxu0 %v1338
  %v1655 = vpop.f32.mrf.mxu0
  %v1656 = vadd.f32 %v1511, %v1655
  %v1657 = vpop.f32.mrf.mxu0
  %v1658 = vpop.f32.mrf.mxu0
  %v1659 = vadd.f32 %v1514, %v1658
  %v1660 = vpop.f32.mrf.mxu0
  %1661 = vmatprep.mubr.bf16.mxu0 0
  %1662 = vmatmul.mubr.bf16.gmra.mxu0 %v1339
  %v1663 = vpop.f32.mrf.mxu0
  %v1664 = vadd.f32 %v1519, %v1663
  %v1665 = vpop.f32.mrf.mxu0
  %v1666 = vpop.f32.mrf.mxu0
  %v1667 = vadd.f32 %v1522, %v1666
  %v1668 = vpop.f32.mrf.mxu0
  %1669 = vdwg.mxu0
  %v1670 = vld [vmem:[%s10] sm:$0x1]
  %v1672 = vlaneseq
  %v1673 = vshrl.u32 %v1672, 7
  %v1674 = vsub.s32 0, %v1673
  %v1675 = vrot.slane %v1670, %v1674
  %v1677 = vadd.f32 %v1608, %v1675
  %v1678 = vadd.f32 %v1611, %v1675
  %v1679 = vadd.f32 %v1616, %v1675
  %v1680 = vadd.f32 %v1619, %v1675
  %v1681 = vadd.f32 %v1624, %v1675
  %v1682 = vadd.f32 %v1627, %v1675
  %v1683 = vadd.f32 %v1632, %v1675
  %v1684 = vadd.f32 %v1635, %v1675
  %v1685 = vadd.f32 %v1640, %v1675
  %v1686 = vadd.f32 %v1643, %v1675
  %v1687 = vadd.f32 %v1648, %v1675
  %v1688 = vadd.f32 %v1651, %v1675
  %v1689 = vadd.f32 %v1656, %v1675
  %v1690 = vadd.f32 %v1659, %v1675
  %v1691 = vadd.f32 %v1664, %v1675
  %v1692 = vadd.f32 %v1667, %v1675
  %1693 = vadd.xlane.f32.xlu0 %v1677
  %v1694 = vpop.xlane.xlu0 %1693
  %1695 = vadd.xlane.f32.xlu0 %v1678
  %v1696 = vpop.xlane.xlu0 %1695
  %1697 = vadd.xlane.f32.xlu0 %v1679
  %v1698 = vpop.xlane.xlu0 %1697
  %1699 = vadd.xlane.f32.xlu0 %v1680
  %v1700 = vpop.xlane.xlu0 %1699
  %1701 = vadd.xlane.f32.xlu0 %v1681
  %v1702 = vpop.xlane.xlu0 %1701
  %1703 = vadd.xlane.f32.xlu0 %v1682
  %v1704 = vpop.xlane.xlu0 %1703
  %1705 = vadd.xlane.f32.xlu0 %v1683
  %v1706 = vpop.xlane.xlu0 %1705
  %1707 = vadd.xlane.f32.xlu0 %v1684
  %v1708 = vpop.xlane.xlu0 %1707
  %1709 = vadd.xlane.f32.xlu0 %v1685
  %v1710 = vpop.xlane.xlu0 %1709
  %1711 = vadd.xlane.f32.xlu0 %v1686
  %v1712 = vpop.xlane.xlu0 %1711
  %1713 = vadd.xlane.f32.xlu0 %v1687
  %v1714 = vpop.xlane.xlu0 %1713
  %1715 = vadd.xlane.f32.xlu0 %v1688
  %v1716 = vpop.xlane.xlu0 %1715
  %1717 = vadd.xlane.f32.xlu0 %v1689
  %v1718 = vpop.xlane.xlu0 %1717
  %1719 = vadd.xlane.f32.xlu0 %v1690
  %v1720 = vpop.xlane.xlu0 %1719
  %1721 = vadd.xlane.f32.xlu0 %v1691
  %v1722 = vpop.xlane.xlu0 %1721
  %1723 = vadd.xlane.f32.xlu0 %v1692
  %v1724 = vpop.xlane.xlu0 %1723
  %v1725 = vmul.f32 %v1694, 0.03125
  %v1726 = vmul.f32 %v1696, 0.03125
  %v1727 = vmul.f32 %v1698, 0.03125
  %v1728 = vmul.f32 %v1700, 0.03125
  %v1729 = vmul.f32 %v1702, 0.03125
  %v1730 = vmul.f32 %v1704, 0.03125
  %v1731 = vmul.f32 %v1706, 0.03125
  %v1732 = vmul.f32 %v1708, 0.03125
  %v1733 = vmul.f32 %v1710, 0.03125
  %v1734 = vmul.f32 %v1712, 0.03125
  %v1735 = vmul.f32 %v1714, 0.03125
  %v1736 = vmul.f32 %v1716, 0.03125
  %v1737 = vmul.f32 %v1718, 0.03125
  %v1738 = vmul.f32 %v1720, 0.03125
  %v1739 = vmul.f32 %v1722, 0.03125
  %v1740 = vmul.f32 %v1724, 0.03125
  %v1741 = vmul.f32 %v1677, %v1677
  %v1742 = vmul.f32 %v1678, %v1678
  %v1743 = vmul.f32 %v1679, %v1679
  %v1744 = vmul.f32 %v1680, %v1680
  %v1745 = vmul.f32 %v1681, %v1681
  %v1746 = vmul.f32 %v1682, %v1682
  %v1747 = vmul.f32 %v1683, %v1683
  %v1748 = vmul.f32 %v1684, %v1684
  %v1749 = vmul.f32 %v1685, %v1685
  %v1750 = vmul.f32 %v1686, %v1686
  %v1751 = vmul.f32 %v1687, %v1687
  %v1752 = vmul.f32 %v1688, %v1688
  %v1753 = vmul.f32 %v1689, %v1689
  %v1754 = vmul.f32 %v1690, %v1690
  %v1755 = vmul.f32 %v1691, %v1691
  %v1756 = vmul.f32 %v1692, %v1692
  %1757 = vadd.xlane.f32.xlu0 %v1741
  %v1758 = vpop.xlane.xlu0 %1757
  %1759 = vadd.xlane.f32.xlu0 %v1742
  %v1760 = vpop.xlane.xlu0 %1759
  %1761 = vadd.xlane.f32.xlu0 %v1743
  %v1762 = vpop.xlane.xlu0 %1761
  %1763 = vadd.xlane.f32.xlu0 %v1744
  %v1764 = vpop.xlane.xlu0 %1763
  %1765 = vadd.xlane.f32.xlu0 %v1745
  %v1766 = vpop.xlane.xlu0 %1765
  %1767 = vadd.xlane.f32.xlu0 %v1746
  %v1768 = vpop.xlane.xlu0 %1767
  %1769 = vadd.xlane.f32.xlu0 %v1747
  %v1770 = vpop.xlane.xlu0 %1769
  %1771 = vadd.xlane.f32.xlu0 %v1748
  %v1772 = vpop.xlane.xlu0 %1771
  %1773 = vadd.xlane.f32.xlu0 %v1749
  %v1774 = vpop.xlane.xlu0 %1773
  %1775 = vadd.xlane.f32.xlu0 %v1750
  %v1776 = vpop.xlane.xlu0 %1775
  %1777 = vadd.xlane.f32.xlu0 %v1751
  %v1778 = vpop.xlane.xlu0 %1777
  %1779 = vadd.xlane.f32.xlu0 %v1752
  %v1780 = vpop.xlane.xlu0 %1779
  %1781 = vadd.xlane.f32.xlu0 %v1753
  %v1782 = vpop.xlane.xlu0 %1781
  %1783 = vadd.xlane.f32.xlu0 %v1754
  %v1784 = vpop.xlane.xlu0 %1783
  %1785 = vadd.xlane.f32.xlu0 %v1755
  %v1786 = vpop.xlane.xlu0 %1785
  %1787 = vadd.xlane.f32.xlu0 %v1756
  %v1788 = vpop.xlane.xlu0 %1787
  %v1789 = vmul.f32 %v1758, 0.03125
  %v1790 = vmul.f32 %v1760, 0.03125
  %v1791 = vmul.f32 %v1762, 0.03125
  %v1792 = vmul.f32 %v1764, 0.03125
  %v1793 = vmul.f32 %v1766, 0.03125
  %v1794 = vmul.f32 %v1768, 0.03125
  %v1795 = vmul.f32 %v1770, 0.03125
  %v1796 = vmul.f32 %v1772, 0.03125
  %v1797 = vmul.f32 %v1774, 0.03125
  %v1798 = vmul.f32 %v1776, 0.03125
  %v1799 = vmul.f32 %v1778, 0.03125
  %v1800 = vmul.f32 %v1780, 0.03125
  %v1801 = vmul.f32 %v1782, 0.03125
  %v1802 = vmul.f32 %v1784, 0.03125
  %v1803 = vmul.f32 %v1786, 0.03125
  %v1804 = vmul.f32 %v1788, 0.03125
  %v1805 = vmul.f32 %v1725, %v1725
  %v1806 = vmul.f32 %v1726, %v1726
  %v1807 = vmul.f32 %v1727, %v1727
  %v1808 = vmul.f32 %v1728, %v1728
  %v1809 = vmul.f32 %v1729, %v1729
  %v1810 = vmul.f32 %v1730, %v1730
  %v1811 = vmul.f32 %v1731, %v1731
  %v1812 = vmul.f32 %v1732, %v1732
  %v1813 = vmul.f32 %v1733, %v1733
  %v1814 = vmul.f32 %v1734, %v1734
  %v1815 = vmul.f32 %v1735, %v1735
  %v1816 = vmul.f32 %v1736, %v1736
  %v1817 = vmul.f32 %v1737, %v1737
  %v1818 = vmul.f32 %v1738, %v1738
  %v1819 = vmul.f32 %v1739, %v1739
  %v1820 = vmul.f32 %v1740, %v1740
  %v1821 = vsub.f32 %v1789, %v1805
  %v1822 = vsub.f32 %v1790, %v1806
  %v1823 = vsub.f32 %v1791, %v1807
  %v1824 = vsub.f32 %v1792, %v1808
  %v1825 = vsub.f32 %v1793, %v1809
  %v1826 = vsub.f32 %v1794, %v1810
  %v1827 = vsub.f32 %v1795, %v1811
  %v1828 = vsub.f32 %v1796, %v1812
  %v1829 = vsub.f32 %v1797, %v1813
  %v1830 = vsub.f32 %v1798, %v1814
  %v1831 = vsub.f32 %v1799, %v1815
  %v1832 = vsub.f32 %v1800, %v1816
  %v1833 = vsub.f32 %v1801, %v1817
  %v1834 = vsub.f32 %v1802, %v1818
  %v1835 = vsub.f32 %v1803, %v1819
  %v1836 = vsub.f32 %v1804, %v1820
  %v1837 = vsub.f32 %v1677, %v1725
  %v1838 = vsub.f32 %v1678, %v1726
  %v1839 = vsub.f32 %v1679, %v1727
  %v1840 = vsub.f32 %v1680, %v1728
  %v1841 = vsub.f32 %v1681, %v1729
  %v1842 = vsub.f32 %v1682, %v1730
  %v1843 = vsub.f32 %v1683, %v1731
  %v1844 = vsub.f32 %v1684, %v1732
  %v1845 = vsub.f32 %v1685, %v1733
  %v1846 = vsub.f32 %v1686, %v1734
  %v1847 = vsub.f32 %v1687, %v1735
  %v1848 = vsub.f32 %v1688, %v1736
  %v1849 = vsub.f32 %v1689, %v1737
  %v1850 = vsub.f32 %v1690, %v1738
  %v1851 = vsub.f32 %v1691, %v1739
  %v1852 = vsub.f32 %v1692, %v1740
  %v1853 = vadd.f32 %v1821, 1e-05
  %v1854 = vadd.f32 %v1822, 1e-05
  %v1855 = vadd.f32 %v1823, 1e-05
  %v1856 = vadd.f32 %v1824, 1e-05
  %v1857 = vadd.f32 %v1825, 1e-05
  %v1858 = vadd.f32 %v1826, 1e-05
  %v1859 = vadd.f32 %v1827, 1e-05
  %v1860 = vadd.f32 %v1828, 1e-05
  %v1861 = vadd.f32 %v1829, 1e-05
  %v1862 = vadd.f32 %v1830, 1e-05
  %v1863 = vadd.f32 %v1831, 1e-05
  %v1864 = vadd.f32 %v1832, 1e-05
  %v1865 = vadd.f32 %v1833, 1e-05
  %v1866 = vadd.f32 %v1834, 1e-05
  %v1867 = vadd.f32 %v1835, 1e-05
  %v1868 = vadd.f32 %v1836, 1e-05
  %v1869 = vrsqrt.pop %v1853
  %v1870 = vrsqrt.pop %v1854
  %v1871 = vrsqrt.pop %v1855
  %v1872 = vrsqrt.pop %v1856
  %v1873 = vrsqrt.pop %v1857
  %v1874 = vrsqrt.pop %v1858
  %v1875 = vrsqrt.pop %v1859
  %v1876 = vrsqrt.pop %v1860
  %v1877 = vrsqrt.pop %v1861
  %v1878 = vrsqrt.pop %v1862
  %v1879 = vrsqrt.pop %v1863
  %v1880 = vrsqrt.pop %v1864
  %v1881 = vrsqrt.pop %v1865
  %v1882 = vrsqrt.pop %v1866
  %v1883 = vrsqrt.pop %v1867
  %v1884 = vrsqrt.pop %v1868
  %v1885 = vmul.f32 %v1837, %v1869
  %v1886 = vmul.f32 %v1838, %v1870
  %v1887 = vmul.f32 %v1839, %v1871
  %v1888 = vmul.f32 %v1840, %v1872
  %v1889 = vmul.f32 %v1841, %v1873
  %v1890 = vmul.f32 %v1842, %v1874
  %v1891 = vmul.f32 %v1843, %v1875
  %v1892 = vmul.f32 %v1844, %v1876
  %v1893 = vmul.f32 %v1845, %v1877
  %v1894 = vmul.f32 %v1846, %v1878
  %v1895 = vmul.f32 %v1847, %v1879
  %v1896 = vmul.f32 %v1848, %v1880
  %v1897 = vmul.f32 %v1849, %v1881
  %v1898 = vmul.f32 %v1850, %v1882
  %v1899 = vmul.f32 %v1851, %v1883
  %v1900 = vmul.f32 %v1852, %v1884
  %v1901 = vld [vmem:[%s11] sm:$0x1]
  %v1903 = vlaneseq
  %v1904 = vshrl.u32 %v1903, 7
  %v1905 = vsub.s32 0, %v1904
  %v1906 = vrot.slane %v1901, %v1905
  %v1908 = vmul.f32 %v1885, %v1906
  %v1909 = vmul.f32 %v1886, %v1906
  %v1910 = vmul.f32 %v1887, %v1906
  %v1911 = vmul.f32 %v1888, %v1906
  %v1912 = vmul.f32 %v1889, %v1906
  %v1913 = vmul.f32 %v1890, %v1906
  %v1914 = vmul.f32 %v1891, %v1906
  %v1915 = vmul.f32 %v1892, %v1906
  %v1916 = vmul.f32 %v1893, %v1906
  %v1917 = vmul.f32 %v1894, %v1906
  %v1918 = vmul.f32 %v1895, %v1906
  %v1919 = vmul.f32 %v1896, %v1906
  %v1920 = vmul.f32 %v1897, %v1906
  %v1921 = vmul.f32 %v1898, %v1906
  %v1922 = vmul.f32 %v1899, %v1906
  %v1923 = vmul.f32 %v1900, %v1906
  %v1924 = vld [vmem:[%s12] sm:$0x1]
  %v1926 = vlaneseq
  %v1927 = vshrl.u32 %v1926, 7
  %v1928 = vsub.s32 0, %v1927
  %v1929 = vrot.slane %v1924, %v1928
  %v1931 = vadd.f32 %v1908, %v1929
  %v1932 = vadd.f32 %v1909, %v1929
  %v1933 = vadd.f32 %v1910, %v1929
  %v1934 = vadd.f32 %v1911, %v1929
  %v1935 = vadd.f32 %v1912, %v1929
  %v1936 = vadd.f32 %v1913, %v1929
  %v1937 = vadd.f32 %v1914, %v1929
  %v1938 = vadd.f32 %v1915, %v1929
  %v1939 = vadd.f32 %v1916, %v1929
  %v1940 = vadd.f32 %v1917, %v1929
  %v1941 = vadd.f32 %v1918, %v1929
  %v1942 = vadd.f32 %v1919, %v1929
  %v1943 = vadd.f32 %v1920, %v1929
  %v1944 = vadd.f32 %v1921, %v1929
  %v1945 = vadd.f32 %v1922, %v1929
  %v1946 = vadd.f32 %v1923, %v1929
  %v1947 = vmax.f32 %v1931, 0.0
  %v1948 = vmax.f32 %v1932, 0.0
  %v1949 = vmax.f32 %v1933, 0.0
  %v1950 = vmax.f32 %v1934, 0.0
  %v1951 = vmax.f32 %v1935, 0.0
  %v1952 = vmax.f32 %v1936, 0.0
  %v1953 = vmax.f32 %v1937, 0.0
  %v1954 = vmax.f32 %v1938, 0.0
  %v1955 = vmax.f32 %v1939, 0.0
  %v1956 = vmax.f32 %v1940, 0.0
  %v1957 = vmax.f32 %v1941, 0.0
  %v1958 = vmax.f32 %v1942, 0.0
  %v1959 = vmax.f32 %v1943, 0.0
  %v1960 = vmax.f32 %v1944, 0.0
  %v1961 = vmax.f32 %v1945, 0.0
  %v1962 = vmax.f32 %v1946, 0.0
  %v1963 = vpack.c.bf16 %v1948, %v1947
  %v1964 = vpack.c.bf16 %v1950, %v1949
  %v1965 = vpack.c.bf16 %v1952, %v1951
  %v1966 = vpack.c.bf16 %v1954, %v1953
  %v1967 = vpack.c.bf16 %v1956, %v1955
  %v1968 = vpack.c.bf16 %v1958, %v1957
  %v1969 = vpack.c.bf16 %v1960, %v1959
  %v1970 = vpack.c.bf16 %v1962, %v1961
  %v1971 = vld [vmem:[%s13] sm:$0xf]
  %v1972 = vld [vmem:[%s13 + $0x4] sm:$0xf]
  %v1973 = vld [vmem:[%s13 + $0x8] sm:$0xf]
  %v1974 = vld [vmem:[%s13 + $0xc] sm:$0xf]
  %v1975 = vld [vmem:[%s13 + $0x10] sm:$0xf]
  %v1976 = vld [vmem:[%s13 + $0x14] sm:$0xf]
  %v1977 = vld [vmem:[%s13 + $0x18] sm:$0xf]
  %v1978 = vld [vmem:[%s13 + $0x1c] sm:$0xf]
  %v1979 = vld [vmem:[%s13 + $0x20] sm:$0xf]
  %v1980 = vld [vmem:[%s13 + $0x24] sm:$0xf]
  %v1981 = vld [vmem:[%s13 + $0x28] sm:$0xf]
  %v1982 = vld [vmem:[%s13 + $0x2c] sm:$0xf]
  %v1983 = vld [vmem:[%s13 + $0x30] sm:$0xf]
  %v1984 = vld [vmem:[%s13 + $0x34] sm:$0xf]
  %v1985 = vld [vmem:[%s13 + $0x38] sm:$0xf]
  %v1986 = vld [vmem:[%s13 + $0x3c] sm:$0xf]
  %v1987 = vld [vmem:[%s14] sm:$0x1]
  %v1989 = vlaneseq
  %v1990 = vshrl.u32 %v1989, 7
  %v1991 = vsub.s32 0, %v1990
  %v1992 = vrot.slane %v1987, %v1991
  %v2010 = vunpack.c.l.b16 %v1971
  %v2011 = vunpack.c.l.b16 %v1972
  %v2012 = vunpack.c.l.b16 %v1973
  %v2013 = vunpack.c.l.b16 %v1974
  %v2014 = vunpack.c.l.b16 %v1975
  %v2015 = vunpack.c.l.b16 %v1976
  %v2016 = vunpack.c.l.b16 %v1977
  %v2017 = vunpack.c.l.b16 %v1978
  %v2018 = vunpack.c.l.b16 %v1979
  %v2019 = vunpack.c.l.b16 %v1980
  %v2020 = vunpack.c.l.b16 %v1981
  %v2021 = vunpack.c.l.b16 %v1982
  %v2022 = vunpack.c.l.b16 %v1983
  %v2023 = vunpack.c.l.b16 %v1984
  %v2024 = vunpack.c.l.b16 %v1985
  %v2025 = vunpack.c.l.b16 %v1986
  %v2026 = vpack.c.b16 %v2011, %v2010
  %v2027 = vpack.c.b16 %v2013, %v2012
  %v2028 = vpack.c.b16 %v2015, %v2014
  %v2029 = vpack.c.b16 %v2017, %v2016
  %v2030 = vpack.c.b16 %v2019, %v2018
  %v2031 = vpack.c.b16 %v2021, %v2020
  %v2032 = vpack.c.b16 %v2023, %v2022
  %v2033 = vpack.c.b16 %v2025, %v2024
  %2042 = vmatprep.subr.bf16.mxu0 0
  %2043 = vmatpush1.bf16.msra.mxu0 %v2033
  %2044 = vmatprep.subr.bf16.mxu0 0
  %2045 = vmatpush1.bf16.msra.mxu0 %v2032
  %2046 = vmatprep.subr.bf16.mxu0 0
  %2047 = vmatpush1.bf16.msra.mxu0 %v2031
  %2048 = vmatprep.subr.bf16.mxu0 0
  %2049 = vmatpush1.bf16.msra.mxu0 %v2030
  %2050 = vmatprep.subr.bf16.mxu0 0
  %2051 = vmatpush1.bf16.msra.mxu0 %v2029
  %2052 = vmatprep.subr.bf16.mxu0 0
  %2053 = vmatpush1.bf16.msra.mxu0 %v2028
  %2054 = vmatprep.subr.bf16.mxu0 0
  %2055 = vmatpush1.bf16.msra.mxu0 %v2027
  %2056 = vmatprep.subr.bf16.mxu0 0
  %2057 = vmatpush1.bf16.msra.mxu0 %v2026
  %2058 = vmatprep.subr.bf16.mxu0 0
  %2059 = vmatpush2.bf16.msra.mxu0 0
  %2060 = vmatprep.subr.bf16.mxu0 0
  %2061 = vmatpush2.bf16.msra.mxu0 0
  %2062 = vmatprep.subr.bf16.mxu0 0
  %2063 = vmatpush2.bf16.msra.mxu0 0
  %2064 = vmatprep.subr.bf16.mxu0 0
  %2065 = vmatpush2.bf16.msra.mxu0 0
  %2066 = vmatprep.subr.bf16.mxu0 0
  %2067 = vmatpush2.bf16.msra.mxu0 0
  %2068 = vmatprep.subr.bf16.mxu0 0
  %2069 = vmatpush2.bf16.msra.mxu0 0
  %2070 = vmatprep.subr.bf16.mxu0 0
  %2071 = vmatpush2.bf16.msra.mxu0 0
  %2072 = vmatprep.subr.bf16.mxu0 0
  %2073 = vmatpush2.bf16.msra.mxu0 0
  %2074 = vmatprep.mubr.bf16.mxu0 0
  %2075 = vmatmul.mubr.bf16.gmra.mxu0 %v1963
  %v2076 = vpop.f32.mrf.mxu0
  %v2077 = vadd.f32 %v1992, %v2076
  %v2078 = vpop.f32.mrf.mxu0
  %v2079 = vpop.f32.mrf.mxu0
  %v2080 = vadd.f32 %v1992, %v2079
  %v2081 = vpop.f32.mrf.mxu0
  %2082 = vmatprep.mubr.bf16.mxu0 0
  %2083 = vmatmul.mubr.bf16.gmra.mxu0 %v1964
  %v2084 = vpop.f32.mrf.mxu0
  %v2085 = vadd.f32 %v1992, %v2084
  %v2086 = vpop.f32.mrf.mxu0
  %v2087 = vpop.f32.mrf.mxu0
  %v2088 = vadd.f32 %v1992, %v2087
  %v2089 = vpop.f32.mrf.mxu0
  %2090 = vmatprep.mubr.bf16.mxu0 0
  %2091 = vmatmul.mubr.bf16.gmra.mxu0 %v1965
  %v2092 = vpop.f32.mrf.mxu0
  %v2093 = vadd.f32 %v1992, %v2092
  %v2094 = vpop.f32.mrf.mxu0
  %v2095 = vpop.f32.mrf.mxu0
  %v2096 = vadd.f32 %v1992, %v2095
  %v2097 = vpop.f32.mrf.mxu0
  %2098 = vmatprep.mubr.bf16.mxu0 0
  %2099 = vmatmul.mubr.bf16.gmra.mxu0 %v1966
  %v2100 = vpop.f32.mrf.mxu0
  %v2101 = vadd.f32 %v1992, %v2100
  %v2102 = vpop.f32.mrf.mxu0
  %v2103 = vpop.f32.mrf.mxu0
  %v2104 = vadd.f32 %v1992, %v2103
  %v2105 = vpop.f32.mrf.mxu0
  %2106 = vmatprep.mubr.bf16.mxu0 0
  %2107 = vmatmul.mubr.bf16.gmra.mxu0 %v1967
  %v2108 = vpop.f32.mrf.mxu0
  %v2109 = vadd.f32 %v1992, %v2108
  %v2110 = vpop.f32.mrf.mxu0
  %v2111 = vpop.f32.mrf.mxu0
  %v2112 = vadd.f32 %v1992, %v2111
  %v2113 = vpop.f32.mrf.mxu0
  %2114 = vmatprep.mubr.bf16.mxu0 0
  %2115 = vmatmul.mubr.bf16.gmra.mxu0 %v1968
  %v2116 = vpop.f32.mrf.mxu0
  %v2117 = vadd.f32 %v1992, %v2116
  %v2118 = vpop.f32.mrf.mxu0
  %v2119 = vpop.f32.mrf.mxu0
  %v2120 = vadd.f32 %v1992, %v2119
  %v2121 = vpop.f32.mrf.mxu0
  %2122 = vmatprep.mubr.bf16.mxu0 0
  %2123 = vmatmul.mubr.bf16.gmra.mxu0 %v1969
  %v2124 = vpop.f32.mrf.mxu0
  %v2125 = vadd.f32 %v1992, %v2124
  %v2126 = vpop.f32.mrf.mxu0
  %v2127 = vpop.f32.mrf.mxu0
  %v2128 = vadd.f32 %v1992, %v2127
  %v2129 = vpop.f32.mrf.mxu0
  %2130 = vmatprep.mubr.bf16.mxu0 0
  %2131 = vmatmul.mubr.bf16.gmra.mxu0 %v1970
  %v2132 = vpop.f32.mrf.mxu0
  %v2133 = vadd.f32 %v1992, %v2132
  %v2134 = vpop.f32.mrf.mxu0
  %v2135 = vpop.f32.mrf.mxu0
  %v2136 = vadd.f32 %v1992, %v2135
  %v2137 = vpop.f32.mrf.mxu0
  %2138 = vdwg.mxu0
  %2139 = vst [vmem:[%s15] sm:$0xff] %v2077
  %2140 = vst [vmem:[%s15 + $0x8] sm:$0xff] %v2080
  %2141 = vst [vmem:[%s15 + $0x10] sm:$0xff] %v2085
  %2142 = vst [vmem:[%s15 + $0x18] sm:$0xff] %v2088
  %2143 = vst [vmem:[%s15 + $0x20] sm:$0xff] %v2093
  %2144 = vst [vmem:[%s15 + $0x28] sm:$0xff] %v2096
  %2145 = vst [vmem:[%s15 + $0x30] sm:$0xff] %v2101
  %2146 = vst [vmem:[%s15 + $0x38] sm:$0xff] %v2104
  %2147 = vst [vmem:[%s15 + $0x40] sm:$0xff] %v2109
  %2148 = vst [vmem:[%s15 + $0x48] sm:$0xff] %v2112
  %2149 = vst [vmem:[%s15 + $0x50] sm:$0xff] %v2117
  %2150 = vst [vmem:[%s15 + $0x58] sm:$0xff] %v2120
  %2151 = vst [vmem:[%s15 + $0x60] sm:$0xff] %v2125
  %2152 = vst [vmem:[%s15 + $0x68] sm:$0xff] %v2128
  %2153 = vst [vmem:[%s15 + $0x70] sm:$0xff] %v2133
  %2154 = vst [vmem:[%s15 + $0x78] sm:$0xff] %v2136
  // Predicated region
  $region62: #{homo_gnn_forward.1} parent=0 // pred_check
    _
  $region63: #{homo_gnn_forward.1} parent=0 // pred_check_branch
    %2156 = sbr.rel (0) target = $region65
  $region64: #{homo_gnn_forward.1} parent=0 // pred_region
    _
  $region65: #{homo_gnn_forward.1} parent=0 // pred_fallthru
    _
  // Predicated region
  $region66: #{homo_gnn_forward.1} parent=0 // pred_check
    _
  $region67: #{homo_gnn_forward.1} parent=0 // pred_check_branch
    %2158 = sbr.rel (0) target = $region69
  $region68: #{homo_gnn_forward.1} parent=0 // pred_region
    _
  $region69: #{homo_gnn_forward.1} parent=0 // pred_fallthru
    _

</llo_original>
